<compile_context>
chip_gen: v7x
topology: tpu7x:2x2x1
jax: 0.10.0
libtpu: 0.0.40
codegen_flags: <defaults>
</compile_context>

<pallas_src>
import numpy as np
import jax
import jax.numpy as jnp
from jax.experimental import pallas as pl
from jax.experimental.pallas import tpu as pltpu

# ----------------------- module config (matches DynamicConv2d defaults) -----------------------
DIM = 4            # dim (channels C)
KSIZE = 3          # kernel_size
REDUCTION = 2      # reduction_ratio
NUM_GROUPS = 8     # num_groups
# TODO(synk): only the bias=True branch of the module is wired up (bias=False would simply
#             drop the bias row / bias bank).


# ===================================== static matrices ======================================

def _adaptive_pool_matrix(in_size, out_size):
    """PyTorch AdaptiveAvgPool1d bucket rule as an averaging matrix (out_size, in_size)."""
    P = np.zeros((out_size, in_size), np.float32)
    for i in range(out_size):
        s = (i * in_size) // out_size
        e = -(-((i + 1) * in_size) // out_size)      # ceil
        P[i, s:e] = 1.0 / float(e - s)
    return P


def _reduction_matrix(H, W, K):
    """(K*K+1, H*W): rows 0..K*K-1 = adaptive-avg-pool taps, row K*K = global mean."""
    Ph = _adaptive_pool_matrix(H, K)
    Pw = _adaptive_pool_matrix(W, K)
    taps = np.einsum("ih,jw->ijhw", Ph, Pw).reshape(K * K, H * W)
    mean = np.full((1, H * W), 1.0 / float(H * W), np.float32)
    return np.concatenate([taps, mean], axis=0).astype(np.float32)


# ======================================= Pallas kernels ======================================

def _mixer_kernel(xT_ref, rt_ref, w1_ref, b1_ref, w2_ref, b2_ref,
                  smat_ref, bank_ref, gsum_ref, o_ref):
    """Fused dynamic-weight/bias computation.  All operands are full VMEM blocks.

    xT   : (H*W, B*C)        input, channels-last-flattened per (b, c)
    rt   : (T, H*W)          static reduction matrix (T = K*K pool taps + 1 mean row)
    w1/b1, w2/b2             batch-block-diagonal 1x1 proj weights (+ reordered columns so
                             the softmax group axis g is minor: column = (b*C + c)*G + g)
    smat : (BCG, BCG)        block-diag ones -> per-group softmax denominator via matmul
    bank : (T, BCG)          weight bank (rows 0..K*K-1) and bias bank (row K*K)
    gsum : (BCG, B*C)        block-diag ones -> sum over g via matmul
    out  : (T, B*C)          per-(b, c) 3x3 taps (rows 0..K*K-1) and bias (row K*K)
    """
    red = jnp.dot(rt_ref[...], xT_ref[...], preferred_element_type=jnp.float32)   # (T, BC)
    s1 = jnp.dot(red, w1_ref[...], preferred_element_type=jnp.float32) + b1_ref[...]
    s2 = jnp.dot(s1, w2_ref[...], preferred_element_type=jnp.float32) + b2_ref[...]
    # softmax over the group axis: row-wide max is constant within each group, so it is a
    # valid (and stable) shift; the per-group denominator is a block-diag ones matmul.
    m = jnp.max(s2, axis=-1, keepdims=True)
    e = jnp.exp(s2 - m)
    denom = jnp.dot(e, smat_ref[...], preferred_element_type=jnp.float32)
    sm = e / denom
    o_ref[...] = jnp.dot(sm * bank_ref[...], gsum_ref[...],
                         preferred_element_type=jnp.float32)


def _make_dwconv_kernel(BC, H, W, K):
    """Depthwise KxK conv with per-(b,c) dynamic weights/bias (weights read from SMEM)."""
    taps = K * K

    def kernel(wd_ref, xp_ref, o_ref):
        # wd_ref : SMEM (K*K+1, BC) -- scalar reads
        # xp_ref : VMEM (BC, H+2*pad, W+2*pad) zero-padded activation
        # o_ref  : VMEM (BC, H, W)
        for n in range(BC):                                   # static unroll over planes
            acc = wd_ref[0, n] * xp_ref[n, 0:H, 0:W]
            for t in range(1, taps):
                di, dj = t // K, t % K
                acc = acc + wd_ref[t, n] * xp_ref[n, di:di + H, dj:dj + W]
            o_ref[n] = acc + wd_ref[taps, n]                  # fused per-(b,c) bias epilogue

    return kernel


# ======================================= forward (jitted) ====================================

def _full_spec(shape):
    return pl.BlockSpec(tuple(shape), lambda i: (0,) * len(shape))


@jax.jit
def dynamic_conv2d_forward(params, x):
    """Pallas implementation of DynamicConv2d.forward.  x: (B, C, H, W) float32."""
    B, C, H, W = x.shape
    K, G = KSIZE, NUM_GROUPS
    BC = B * C
    T = K * K + 1                      # K*K conv taps + 1 bias slot
    pad = K // 2

    # ---- static (shape-only) matrices: become compile-time constants under jit ----
    rt = jnp.asarray(_reduction_matrix(H, W, K))                                   # (T, HW)
    smat = jnp.asarray(np.kron(np.eye(BC, dtype=np.float32),
                               np.ones((G, G), np.float32)))                       # (BCG, BCG)
    gsum = jnp.asarray(np.kron(np.eye(BC, dtype=np.float32),
                               np.ones((G, 1), np.float32)))                       # (BCG, BC)

    # ---- fold the two 1x1 proj convs into batch-block-diagonal matmuls ----
    w1 = params["proj1_w"][:, :, 0, 0]                          # (Cmid, C)
    w2 = params["proj2_w"][:, :, 0, 0]                          # (C*G, Cmid), channel = g*C + c
    # reorder proj output channels from (g*C + c) to (c*G + g) so softmax groups are
    # contiguous along the minor (lane) axis
    j = np.arange(C * G)
    old_idx = (j % G) * C + (j // G)
    w2p = w2[old_idx, :]
    b2p = params["proj2_b"][old_idx]

    eyeB = jnp.eye(B, dtype=jnp.float32)
    w1blk = jnp.kron(eyeB, w1.T)                                # (B*C,   B*Cmid)
    b1blk = jnp.tile(params["proj1_b"], B)[None, :]             # (1,     B*Cmid)
    w2blk = jnp.kron(eyeB, w2p.T)                               # (B*Cmid, B*C*G)
    b2blk = jnp.tile(b2p, B)[None, :]                           # (1,     B*C*G)

    # ---- weight / bias banks laid out as (T, (b, c, g)) with g minor ----
    wbank = jnp.transpose(params["weight"].reshape(G, C, K * K), (2, 1, 0))        # (K*K, C, G)
    bbank = jnp.transpose(params["bias"], (1, 0))[None]                            # (1,   C, G)
    bank = jnp.concatenate([wbank, bbank], axis=0).reshape(T, C * G)
    bank = jnp.tile(bank, (1, B))                                                  # (T, B*C*G)

    # ---- input layouts for the two kernels (tiny, fused by XLA under jit) ----
    xT = x.astype(jnp.float32).reshape(BC, H * W).T                                # (HW, BC)
    xpad = jnp.pad(x.astype(jnp.float32).reshape(BC, H, W),
                   ((0, 0), (pad, pad), (pad, pad)))                               # (BC, H+2p, W+2p)

    # ---- kernel A: per-(b,c) dynamic 3x3 taps + bias ----
    wd = pl.pallas_call(
        _mixer_kernel,
        grid=(1,),
        in_specs=[_full_spec(xT.shape), _full_spec(rt.shape),
                  _full_spec(w1blk.shape), _full_spec(b1blk.shape),
                  _full_spec(w2blk.shape), _full_spec(b2blk.shape),
                  _full_spec(smat.shape), _full_spec(bank.shape),
                  _full_spec(gsum.shape)],
        out_specs=_full_spec((T, BC)),
        out_shape=jax.ShapeDtypeStruct((T, BC), jnp.float32),
    )(xT, rt, w1blk, b1blk, w2blk, b2blk, smat, bank, gsum)

    # ---- kernel B: dynamic depthwise conv (weights/bias as SMEM scalars) ----
    out = pl.pallas_call(
        _make_dwconv_kernel(BC, H, W, K),
        grid=(1,),
        in_specs=[pl.BlockSpec(memory_space=pltpu.MemorySpace.SMEM),
                  _full_spec(xpad.shape)],
        out_specs=_full_spec((BC, H, W)),
        out_shape=jax.ShapeDtypeStruct((BC, H, W), jnp.float32),
    )(wd, xpad)

    return out.reshape(B, C, H, W)


# ==================================== pure-JAX reference =====================================

def dynamic_conv2d_reference(params, x):
    """Straightforward jnp port of the PyTorch forward (for correctness checking)."""
    B, C, H, W = x.shape
    K, G = KSIZE, NUM_GROUPS

    def proj(v):  # v: (B, C, h, w)
        h = jnp.einsum("oc,bchw->bohw", params["proj1_w"][:, :, 0, 0], v) \
            + params["proj1_b"][None, :, None, None]
        return jnp.einsum("oc,bchw->bohw", params["proj2_w"][:, :, 0, 0], h) \
            + params["proj2_b"][None, :, None, None]

    Ph = jnp.asarray(_adaptive_pool_matrix(H, K))
    Pw = jnp.asarray(_adaptive_pool_matrix(W, K))
    pooled = jnp.einsum("ih,bchw,jw->bcij", Ph, x, Pw)          # AdaptiveAvgPool2d((K,K))

    scale = jax.nn.softmax(proj(pooled).reshape(B, G, C, K, K), axis=1)
    weight = jnp.sum(scale * params["weight"][None], axis=1)    # (B, C, K, K)

    gm = jnp.mean(x, axis=(2, 3), keepdims=True)
    sb = jax.nn.softmax(proj(gm).reshape(B, G, C), axis=1)
    bias = jnp.sum(sb * params["bias"][None], axis=1)           # (B, C)

    pad = K // 2
    xp = jnp.pad(x, ((0, 0), (0, 0), (pad, pad), (pad, pad)))
    cols = [xp[:, :, di:di + H, dj:dj + W] for di in range(K) for dj in range(K)]
    patches = jnp.stack(cols, axis=-1)                          # (B, C, H, W, K*K)
    out = jnp.sum(patches * weight.reshape(B, C, 1, 1, K * K), axis=-1)
    return out + bias[:, :, None, None]


# ======================================= param init =========================================

def init_params(key):
    C, K, G = DIM, KSIZE, NUM_GROUPS
    Cmid = C // REDUCTION
    kw, kb, k1w, k1b, k2w, k2b = jax.random.split(key, 6)

    def trunc(k, shape, std=0.02):
        return std * jnp.clip(jax.random.normal(k, shape, jnp.float32), -2.0, 2.0)

    return {
        "weight": trunc(kw, (G, C, K, K)),                       # nn.init.trunc_normal_(std=0.02)
        "bias": trunc(kb, (G, C)),
        "proj1_w": 0.1 * jax.random.normal(k1w, (Cmid, C, 1, 1), jnp.float32),
        "proj1_b": 0.1 * jax.random.normal(k1b, (Cmid,), jnp.float32),
        "proj2_w": 0.1 * jax.random.normal(k2w, (C * G, Cmid, 1, 1), jnp.float32),
        "proj2_b": 0.1 * jax.random.normal(k2b, (C * G,), jnp.float32),
    }


# ==============================================================================================

if __name__ == "__main__":
    key = jax.random.PRNGKey(0)
    kx, kp = jax.random.split(key)

    B, C, H, W = 2, DIM, 16, 16
    x = jax.random.normal(kx, (B, C, H, W), dtype=jnp.float32)
    params = init_params(kp)

    out = dynamic_conv2d_forward(params, x)
    out = jax.block_until_ready(out)

    assert out.shape == (B, C, H, W)
    assert bool(jnp.all(jnp.isfinite(out)))

    ref = dynamic_conv2d_reference(params, x)
    err = float(jnp.max(jnp.abs(out - ref)))
    assert err < 1e-4, f"mismatch vs pure-JAX reference: max abs err = {err}"

    print("KERNEL_OK")
</pallas_src>

<mosaic_0001>
module attributes {stable_mosaic.version = 11 : i64} {
  func.func @_mixer_kernel(%arg0: i32, %arg1: memref<256x8xf32, #tpu.memory_space<vmem>>, %arg2: memref<10x256xf32, #tpu.memory_space<vmem>>, %arg3: memref<8x4xf32, #tpu.memory_space<vmem>>, %arg4: memref<1x4xf32, #tpu.memory_space<vmem>>, %arg5: memref<4x64xf32, #tpu.memory_space<vmem>>, %arg6: memref<1x64xf32, #tpu.memory_space<vmem>>, %arg7: memref<64x64xf32, #tpu.memory_space<vmem>>, %arg8: memref<10x64xf32, #tpu.memory_space<vmem>>, %arg9: memref<64x8xf32, #tpu.memory_space<vmem>>, %arg10: memref<10x8xf32, #tpu.memory_space<vmem>>) attributes {dimension_semantics = [#tpu.dimension_semantics<arbitrary>], iteration_bounds = array<i64: 1>, scalar_prefetch = 0 : i64, scratch_operands = 0 : i64, tpu.core_type = #tpu.core_type<tc>, window_params = [{pipeline_mode = #tpu.pipeline_mode<synchronous>, transform_indices = @transform_0, window_bounds = array<i64: 256, 8>}, {pipeline_mode = #tpu.pipeline_mode<synchronous>, transform_indices = @transform_1, window_bounds = array<i64: 10, 256>}, {pipeline_mode = #tpu.pipeline_mode<synchronous>, transform_indices = @transform_2, window_bounds = array<i64: 8, 4>}, {pipeline_mode = #tpu.pipeline_mode<synchronous>, transform_indices = @transform_3, window_bounds = array<i64: 1, 4>}, {pipeline_mode = #tpu.pipeline_mode<synchronous>, transform_indices = @transform_4, window_bounds = array<i64: 4, 64>}, {pipeline_mode = #tpu.pipeline_mode<synchronous>, transform_indices = @transform_5, window_bounds = array<i64: 1, 64>}, {pipeline_mode = #tpu.pipeline_mode<synchronous>, transform_indices = @transform_6, window_bounds = array<i64: 64, 64>}, {pipeline_mode = #tpu.pipeline_mode<synchronous>, transform_indices = @transform_7, window_bounds = array<i64: 10, 64>}, {pipeline_mode = #tpu.pipeline_mode<synchronous>, transform_indices = @transform_8, window_bounds = array<i64: 64, 8>}, {pipeline_mode = #tpu.pipeline_mode<synchronous>, transform_indices = @transform_9, window_bounds = array<i64: 10, 8>}]} {
    %c0 = arith.constant 0 : index
    %c0_0 = arith.constant 0 : index
    %0 = vector.load %arg2[%c0, %c0_0] : memref<10x256xf32, #tpu.memory_space<vmem>>, vector<10x256xf32>
    %c0_1 = arith.constant 0 : index
    %c0_2 = arith.constant 0 : index
    %1 = vector.load %arg1[%c0_1, %c0_2] : memref<256x8xf32, #tpu.memory_space<vmem>>, vector<256x8xf32>
    %cst = arith.constant dense<0.000000e+00> : vector<10x8xf32>
    %2 = tpu.matmul %0, %1, %cst {dimension_numbers = #tpu.dot_dimension_numbers<[1], [0], [0], [1], [0, 0, 1, 1], [], []>} : vector<10x256xf32>, vector<256x8xf32>, vector<10x8xf32> -> vector<10x8xf32>
    %c0_3 = arith.constant 0 : index
    %c0_4 = arith.constant 0 : index
    %3 = vector.load %arg3[%c0_3, %c0_4] : memref<8x4xf32, #tpu.memory_space<vmem>>, vector<8x4xf32>
    %cst_5 = arith.constant dense<0.000000e+00> : vector<10x4xf32>
    %4 = tpu.matmul %2, %3, %cst_5 {dimension_numbers = #tpu.dot_dimension_numbers<[1], [0], [0], [1], [0, 0, 1, 1], [], []>} : vector<10x8xf32>, vector<8x4xf32>, vector<10x4xf32> -> vector<10x4xf32>
    %c0_6 = arith.constant 0 : index
    %c0_7 = arith.constant 0 : index
    %5 = vector.load %arg4[%c0_6, %c0_7] : memref<1x4xf32, #tpu.memory_space<vmem>>, vector<1x4xf32>
    %6 = vector.broadcast %5 : vector<1x4xf32> to vector<10x4xf32>
    %7 = arith.addf %4, %6 : vector<10x4xf32>
    %c0_8 = arith.constant 0 : index
    %c0_9 = arith.constant 0 : index
    %8 = vector.load %arg5[%c0_8, %c0_9] : memref<4x64xf32, #tpu.memory_space<vmem>>, vector<4x64xf32>
    %cst_10 = arith.constant dense<0.000000e+00> : vector<10x64xf32>
    %9 = tpu.matmul %7, %8, %cst_10 {dimension_numbers = #tpu.dot_dimension_numbers<[1], [0], [0], [1], [0, 0, 1, 1], [], []>} : vector<10x4xf32>, vector<4x64xf32>, vector<10x64xf32> -> vector<10x64xf32>
    %c0_11 = arith.constant 0 : index
    %c0_12 = arith.constant 0 : index
    %10 = vector.load %arg6[%c0_11, %c0_12] : memref<1x64xf32, #tpu.memory_space<vmem>>, vector<1x64xf32>
    %11 = vector.broadcast %10 : vector<1x64xf32> to vector<10x64xf32>
    %12 = arith.addf %9, %11 : vector<10x64xf32>
    %cst_13 = arith.constant dense<0xFF800000> : vector<10xf32>
    %13 = vector.multi_reduction <maximumf>, %12, %cst_13 [1] : vector<10x64xf32> to vector<10xf32>
    %14 = vector.shape_cast %13 : vector<10xf32> to vector<10x1xf32>
    %15 = vector.broadcast %14 : vector<10x1xf32> to vector<10x64xf32>
    %16 = arith.subf %12, %15 : vector<10x64xf32>
    %17 = math.exp %16 : vector<10x64xf32>
    %c0_14 = arith.constant 0 : index
    %c0_15 = arith.constant 0 : index
    %18 = vector.load %arg7[%c0_14, %c0_15] : memref<64x64xf32, #tpu.memory_space<vmem>>, vector<64x64xf32>
    %cst_16 = arith.constant dense<0.000000e+00> : vector<10x64xf32>
    %19 = tpu.matmul %17, %18, %cst_16 {dimension_numbers = #tpu.dot_dimension_numbers<[1], [0], [0], [1], [0, 0, 1, 1], [], []>} : vector<10x64xf32>, vector<64x64xf32>, vector<10x64xf32> -> vector<10x64xf32>
    %20 = arith.divf %17, %19 : vector<10x64xf32>
    %c0_17 = arith.constant 0 : index
    %c0_18 = arith.constant 0 : index
    %21 = vector.load %arg8[%c0_17, %c0_18] : memref<10x64xf32, #tpu.memory_space<vmem>>, vector<10x64xf32>
    %22 = arith.mulf %20, %21 : vector<10x64xf32>
    %c0_19 = arith.constant 0 : index
    %c0_20 = arith.constant 0 : index
    %23 = vector.load %arg9[%c0_19, %c0_20] : memref<64x8xf32, #tpu.memory_space<vmem>>, vector<64x8xf32>
    %cst_21 = arith.constant dense<0.000000e+00> : vector<10x8xf32>
    %24 = tpu.matmul %22, %23, %cst_21 {dimension_numbers = #tpu.dot_dimension_numbers<[1], [0], [0], [1], [0, 0, 1, 1], [], []>} : vector<10x64xf32>, vector<64x8xf32>, vector<10x8xf32> -> vector<10x8xf32>
    %c0_22 = arith.constant 0 : index
    %c0_23 = arith.constant 0 : index
    %25 = vector.load %arg10[%c0_22, %c0_23] : memref<10x8xf32, #tpu.memory_space<vmem>>, vector<10x8xf32>
    tpu.vector_store %arg10[%c0_22, %c0_23], %24 {strides = array<i32>} : memref<10x8xf32, #tpu.memory_space<vmem>>, vector<10x8xf32>,
    return
  }
  func.func @transform_0(%arg0: i32) -> (i32, i32) {
    %c0_i32 = arith.constant 0 : i32
    %c0_i32_0 = arith.constant 0 : i32
    %c0_i32_1 = arith.constant 0 : i32
    return %c0_i32, %c0_i32_0 : i32, i32
  }
  func.func @transform_1(%arg0: i32) -> (i32, i32) {
    %c0_i32 = arith.constant 0 : i32
    %c0_i32_0 = arith.constant 0 : i32
    %c0_i32_1 = arith.constant 0 : i32
    return %c0_i32, %c0_i32_0 : i32, i32
  }
  func.func @transform_2(%arg0: i32) -> (i32, i32) {
    %c0_i32 = arith.constant 0 : i32
    %c0_i32_0 = arith.constant 0 : i32
    %c0_i32_1 = arith.constant 0 : i32
    return %c0_i32, %c0_i32_0 : i32, i32
  }
  func.func @transform_3(%arg0: i32) -> (i32, i32) {
    %c0_i32 = arith.constant 0 : i32
    %c0_i32_0 = arith.constant 0 : i32
    %c0_i32_1 = arith.constant 0 : i32
    return %c0_i32, %c0_i32_0 : i32, i32
  }
  func.func @transform_4(%arg0: i32) -> (i32, i32) {
    %c0_i32 = arith.constant 0 : i32
    %c0_i32_0 = arith.constant 0 : i32
    %c0_i32_1 = arith.constant 0 : i32
    return %c0_i32, %c0_i32_0 : i32, i32
  }
  func.func @transform_5(%arg0: i32) -> (i32, i32) {
    %c0_i32 = arith.constant 0 : i32
    %c0_i32_0 = arith.constant 0 : i32
    %c0_i32_1 = arith.constant 0 : i32
    return %c0_i32, %c0_i32_0 : i32, i32
  }
  func.func @transform_6(%arg0: i32) -> (i32, i32) {
    %c0_i32 = arith.constant 0 : i32
    %c0_i32_0 = arith.constant 0 : i32
    %c0_i32_1 = arith.constant 0 : i32
    return %c0_i32, %c0_i32_0 : i32, i32
  }
  func.func @transform_7(%arg0: i32) -> (i32, i32) {
    %c0_i32 = arith.constant 0 : i32
    %c0_i32_0 = arith.constant 0 : i32
    %c0_i32_1 = arith.constant 0 : i32
    return %c0_i32, %c0_i32_0 : i32, i32
  }
  func.func @transform_8(%arg0: i32) -> (i32, i32) {
    %c0_i32 = arith.constant 0 : i32
    %c0_i32_0 = arith.constant 0 : i32
    %c0_i32_1 = arith.constant 0 : i32
    return %c0_i32, %c0_i32_0 : i32, i32
  }
  func.func @transform_9(%arg0: i32) -> (i32, i32) {
    %c0_i32 = arith.constant 0 : i32
    %c0_i32_0 = arith.constant 0 : i32
    %c0_i32_1 = arith.constant 0 : i32
    return %c0_i32, %c0_i32_0 : i32, i32
  }
}

module attributes {stable_mosaic.version = 11 : i64} {
  func.func @kernel(%arg0: i32, %arg1: memref<10x8xf32, #tpu.memory_space<smem>>, %arg2: memref<8x18x18xf32, #tpu.memory_space<vmem>>, %arg3: memref<8x16x16xf32, #tpu.memory_space<vmem>>) attributes {dimension_semantics = [#tpu.dimension_semantics<arbitrary>], iteration_bounds = array<i64: 1>, scalar_prefetch = 0 : i64, scratch_operands = 0 : i64, tpu.core_type = #tpu.core_type<tc>, window_params = [{transform_indices = @transform_0, window_bounds = array<i64: 10, 8>}, {pipeline_mode = #tpu.pipeline_mode<synchronous>, transform_indices = @transform_1, window_bounds = array<i64: 8, 18, 18>}, {pipeline_mode = #tpu.pipeline_mode<synchronous>, transform_indices = @transform_2, window_bounds = array<i64: 8, 16, 16>}]} {
    %c0 = arith.constant 0 : index
    %c0_0 = arith.constant 0 : index
    %0 = memref.load %arg1[%c0, %c0_0] : memref<10x8xf32, #tpu.memory_space<smem>>
    %c0_1 = arith.constant 0 : index
    %c0_2 = arith.constant 0 : index
    %c0_3 = arith.constant 0 : index
    %1 = vector.load %arg2[%c0_1, %c0_2, %c0_3] : memref<8x18x18xf32, #tpu.memory_space<vmem>>, vector<1x16x16xf32>
    %2 = vector.shape_cast %1 : vector<1x16x16xf32> to vector<16x16xf32>
    %3 = vector.broadcast %0 : f32 to vector<16x16xf32>
    %4 = arith.mulf %3, %2 : vector<16x16xf32>
    %c1 = arith.constant 1 : index
    %c0_4 = arith.constant 0 : index
    %5 = memref.load %arg1[%c1, %c0_4] : memref<10x8xf32, #tpu.memory_space<smem>>
    %c0_5 = arith.constant 0 : index
    %c0_6 = arith.constant 0 : index
    %c1_7 = arith.constant 1 : index
    %6 = vector.load %arg2[%c0_5, %c0_6, %c1_7] : memref<8x18x18xf32, #tpu.memory_space<vmem>>, vector<1x16x16xf32>
    %7 = vector.shape_cast %6 : vector<1x16x16xf32> to vector<16x16xf32>
    %8 = vector.broadcast %5 : f32 to vector<16x16xf32>
    %9 = arith.mulf %8, %7 : vector<16x16xf32>
    %10 = arith.addf %4, %9 : vector<16x16xf32>
    %c2 = arith.constant 2 : index
    %c0_8 = arith.constant 0 : index
    %11 = memref.load %arg1[%c2, %c0_8] : memref<10x8xf32, #tpu.memory_space<smem>>
    %c0_9 = arith.constant 0 : index
    %c0_10 = arith.constant 0 : index
    %c2_11 = arith.constant 2 : index
    %12 = vector.load %arg2[%c0_9, %c0_10, %c2_11] : memref<8x18x18xf32, #tpu.memory_space<vmem>>, vector<1x16x16xf32>
    %13 = vector.shape_cast %12 : vector<1x16x16xf32> to vector<16x16xf32>
    %14 = vector.broadcast %11 : f32 to vector<16x16xf32>
    %15 = arith.mulf %14, %13 : vector<16x16xf32>
    %16 = arith.addf %10, %15 : vector<16x16xf32>
    %c3 = arith.constant 3 : index
    %c0_12 = arith.constant 0 : index
    %17 = memref.load %arg1[%c3, %c0_12] : memref<10x8xf32, #tpu.memory_space<smem>>
    %c0_13 = arith.constant 0 : index
    %c1_14 = arith.constant 1 : index
    %c0_15 = arith.constant 0 : index
    %18 = vector.load %arg2[%c0_13, %c1_14, %c0_15] : memref<8x18x18xf32, #tpu.memory_space<vmem>>, vector<1x16x16xf32>
    %19 = vector.shape_cast %18 : vector<1x16x16xf32> to vector<16x16xf32>
    %20 = vector.broadcast %17 : f32 to vector<16x16xf32>
    %21 = arith.mulf %20, %19 : vector<16x16xf32>
    %22 = arith.addf %16, %21 : vector<16x16xf32>
    %c4 = arith.constant 4 : index
    %c0_16 = arith.constant 0 : index
    %23 = memref.load %arg1[%c4, %c0_16] : memref<10x8xf32, #tpu.memory_space<smem>>
    %c0_17 = arith.constant 0 : index
    %c1_18 = arith.constant 1 : index
    %c1_19 = arith.constant 1 : index
    %24 = vector.load %arg2[%c0_17, %c1_18, %c1_19] : memref<8x18x18xf32, #tpu.memory_space<vmem>>, vector<1x16x16xf32>
    %25 = vector.shape_cast %24 : vector<1x16x16xf32> to vector<16x16xf32>
    %26 = vector.broadcast %23 : f32 to vector<16x16xf32>
    %27 = arith.mulf %26, %25 : vector<16x16xf32>
    %28 = arith.addf %22, %27 : vector<16x16xf32>
    %c5 = arith.constant 5 : index
    %c0_20 = arith.constant 0 : index
    %29 = memref.load %arg1[%c5, %c0_20] : memref<10x8xf32, #tpu.memory_space<smem>>
    %c0_21 = arith.constant 0 : index
    %c1_22 = arith.constant 1 : index
    %c2_23 = arith.constant 2 : index
    %30 = vector.load %arg2[%c0_21, %c1_22, %c2_23] : memref<8x18x18xf32, #tpu.memory_space<vmem>>, vector<1x16x16xf32>
    %31 = vector.shape_cast %30 : vector<1x16x16xf32> to vector<16x16xf32>
    %32 = vector.broadcast %29 : f32 to vector<16x16xf32>
    %33 = arith.mulf %32, %31 : vector<16x16xf32>
    %34 = arith.addf %28, %33 : vector<16x16xf32>
    %c6 = arith.constant 6 : index
    %c0_24 = arith.constant 0 : index
    %35 = memref.load %arg1[%c6, %c0_24] : memref<10x8xf32, #tpu.memory_space<smem>>
    %c0_25 = arith.constant 0 : index
    %c2_26 = arith.constant 2 : index
    %c0_27 = arith.constant 0 : index
    %36 = vector.load %arg2[%c0_25, %c2_26, %c0_27] : memref<8x18x18xf32, #tpu.memory_space<vmem>>, vector<1x16x16xf32>
    %37 = vector.shape_cast %36 : vector<1x16x16xf32> to vector<16x16xf32>
    %38 = vector.broadcast %35 : f32 to vector<16x16xf32>
    %39 = arith.mulf %38, %37 : vector<16x16xf32>
    %40 = arith.addf %34, %39 : vector<16x16xf32>
    %c7 = arith.constant 7 : index
    %c0_28 = arith.constant 0 : index
    %41 = memref.load %arg1[%c7, %c0_28] : memref<10x8xf32, #tpu.memory_space<smem>>
    %c0_29 = arith.constant 0 : index
    %c2_30 = arith.constant 2 : index
    %c1_31 = arith.constant 1 : index
    %42 = vector.load %arg2[%c0_29, %c2_30, %c1_31] : memref<8x18x18xf32, #tpu.memory_space<vmem>>, vector<1x16x16xf32>
    %43 = vector.shape_cast %42 : vector<1x16x16xf32> to vector<16x16xf32>
    %44 = vector.broadcast %41 : f32 to vector<16x16xf32>
    %45 = arith.mulf %44, %43 : vector<16x16xf32>
    %46 = arith.addf %40, %45 : vector<16x16xf32>
    %c8 = arith.constant 8 : index
    %c0_32 = arith.constant 0 : index
    %47 = memref.load %arg1[%c8, %c0_32] : memref<10x8xf32, #tpu.memory_space<smem>>
    %c0_33 = arith.constant 0 : index
    %c2_34 = arith.constant 2 : index
    %c2_35 = arith.constant 2 : index
    %48 = vector.load %arg2[%c0_33, %c2_34, %c2_35] : memref<8x18x18xf32, #tpu.memory_space<vmem>>, vector<1x16x16xf32>
    %49 = vector.shape_cast %48 : vector<1x16x16xf32> to vector<16x16xf32>
    %50 = vector.broadcast %47 : f32 to vector<16x16xf32>
    %51 = arith.mulf %50, %49 : vector<16x16xf32>
    %52 = arith.addf %46, %51 : vector<16x16xf32>
    %c9 = arith.constant 9 : index
    %c0_36 = arith.constant 0 : index
    %53 = memref.load %arg1[%c9, %c0_36] : memref<10x8xf32, #tpu.memory_space<smem>>
    %54 = vector.broadcast %53 : f32 to vector<16x16xf32>
    %55 = arith.addf %52, %54 : vector<16x16xf32>
    %c0_37 = arith.constant 0 : index
    %c0_38 = arith.constant 0 : index
    %c0_39 = arith.constant 0 : index
    %56 = vector.load %arg3[%c0_37, %c0_38, %c0_39] : memref<8x16x16xf32, #tpu.memory_space<vmem>>, vector<1x16x16xf32>
    %57 = vector.shape_cast %56 : vector<1x16x16xf32> to vector<16x16xf32>
    %58 = vector.shape_cast %55 : vector<16x16xf32> to vector<1x16x16xf32>
    tpu.vector_store %arg3[%c0_37, %c0_38, %c0_39], %58 {strides = array<i32>} : memref<8x16x16xf32, #tpu.memory_space<vmem>>, vector<1x16x16xf32>,
    %c0_40 = arith.constant 0 : index
    %c1_41 = arith.constant 1 : index
    %59 = memref.load %arg1[%c0_40, %c1_41] : memref<10x8xf32, #tpu.memory_space<smem>>
    %c1_42 = arith.constant 1 : index
    %c0_43 = arith.constant 0 : index
    %c0_44 = arith.constant 0 : index
    %60 = vector.load %arg2[%c1_42, %c0_43, %c0_44] : memref<8x18x18xf32, #tpu.memory_space<vmem>>, vector<1x16x16xf32>
    %61 = vector.shape_cast %60 : vector<1x16x16xf32> to vector<16x16xf32>
    %62 = vector.broadcast %59 : f32 to vector<16x16xf32>
    %63 = arith.mulf %62, %61 : vector<16x16xf32>
    %c1_45 = arith.constant 1 : index
    %c1_46 = arith.constant 1 : index
    %64 = memref.load %arg1[%c1_45, %c1_46] : memref<10x8xf32, #tpu.memory_space<smem>>
    %c1_47 = arith.constant 1 : index
    %c0_48 = arith.constant 0 : index
    %c1_49 = arith.constant 1 : index
    %65 = vector.load %arg2[%c1_47, %c0_48, %c1_49] : memref<8x18x18xf32, #tpu.memory_space<vmem>>, vector<1x16x16xf32>
    %66 = vector.shape_cast %65 : vector<1x16x16xf32> to vector<16x16xf32>
    %67 = vector.broadcast %64 : f32 to vector<16x16xf32>
    %68 = arith.mulf %67, %66 : vector<16x16xf32>
    %69 = arith.addf %63, %68 : vector<16x16xf32>
    %c2_50 = arith.constant 2 : index
    %c1_51 = arith.constant 1 : index
    %70 = memref.load %arg1[%c2_50, %c1_51] : memref<10x8xf32, #tpu.memory_space<smem>>
    %c1_52 = arith.constant 1 : index
    %c0_53 = arith.constant 0 : index
    %c2_54 = arith.constant 2 : index
    %71 = vector.load %arg2[%c1_52, %c0_53, %c2_54] : memref<8x18x18xf32, #tpu.memory_space<vmem>>, vector<1x16x16xf32>
    %72 = vector.shape_cast %71 : vector<1x16x16xf32> to vector<16x16xf32>
    %73 = vector.broadcast %70 : f32 to vector<16x16xf32>
    %74 = arith.mulf %73, %72 : vector<16x16xf32>
    %75 = arith.addf %69, %74 : vector<16x16xf32>
    %c3_55 = arith.constant 3 : index
    %c1_56 = arith.constant 1 : index
    %76 = memref.load %arg1[%c3_55, %c1_56] : memref<10x8xf32, #tpu.memory_space<smem>>
    %c1_57 = arith.constant 1 : index
    %c1_58 = arith.constant 1 : index
    %c0_59 = arith.constant 0 : index
    %77 = vector.load %arg2[%c1_57, %c1_58, %c0_59] : memref<8x18x18xf32, #tpu.memory_space<vmem>>, vector<1x16x16xf32>
    %78 = vector.shape_cast %77 : vector<1x16x16xf32> to vector<16x16xf32>
    %79 = vector.broadcast %76 : f32 to vector<16x16xf32>
    %80 = arith.mulf %79, %78 : vector<16x16xf32>
    %81 = arith.addf %75, %80 : vector<16x16xf32>
    %c4_60 = arith.constant 4 : index
    %c1_61 = arith.constant 1 : index
    %82 = memref.load %arg1[%c4_60, %c1_61] : memref<10x8xf32, #tpu.memory_space<smem>>
    %c1_62 = arith.constant 1 : index
    %c1_63 = arith.constant 1 : index
    %c1_64 = arith.constant 1 : index
    %83 = vector.load %arg2[%c1_62, %c1_63, %c1_64] : memref<8x18x18xf32, #tpu.memory_space<vmem>>, vector<1x16x16xf32>
    %84 = vector.shape_cast %83 : vector<1x16x16xf32> to vector<16x16xf32>
    %85 = vector.broadcast %82 : f32 to vector<16x16xf32>
    %86 = arith.mulf %85, %84 : vector<16x16xf32>
    %87 = arith.addf %81, %86 : vector<16x16xf32>
    %c5_65 = arith.constant 5 : index
    %c1_66 = arith.constant 1 : index
    %88 = memref.load %arg1[%c5_65, %c1_66] : memref<10x8xf32, #tpu.memory_space<smem>>
    %c1_67 = arith.constant 1 : index
    %c1_68 = arith.constant 1 : index
    %c2_69 = arith.constant 2 : index
    %89 = vector.load %arg2[%c1_67, %c1_68, %c2_69] : memref<8x18x18xf32, #tpu.memory_space<vmem>>, vector<1x16x16xf32>
    %90 = vector.shape_cast %89 : vector<1x16x16xf32> to vector<16x16xf32>
    %91 = vector.broadcast %88 : f32 to vector<16x16xf32>
    %92 = arith.mulf %91, %90 : vector<16x16xf32>
    %93 = arith.addf %87, %92 : vector<16x16xf32>
    %c6_70 = arith.constant 6 : index
    %c1_71 = arith.constant 1 : index
    %94 = memref.load %arg1[%c6_70, %c1_71] : memref<10x8xf32, #tpu.memory_space<smem>>
    %c1_72 = arith.constant 1 : index
    %c2_73 = arith.constant 2 : index
    %c0_74 = arith.constant 0 : index
    %95 = vector.load %arg2[%c1_72, %c2_73, %c0_74] : memref<8x18x18xf32, #tpu.memory_space<vmem>>, vector<1x16x16xf32>
    %96 = vector.shape_cast %95 : vector<1x16x16xf32> to vector<16x16xf32>
    %97 = vector.broadcast %94 : f32 to vector<16x16xf32>
    %98 = arith.mulf %97, %96 : vector<16x16xf32>
    %99 = arith.addf %93, %98 : vector<16x16xf32>
    %c7_75 = arith.constant 7 : index
    %c1_76 = arith.constant 1 : index
    %100 = memref.load %arg1[%c7_75, %c1_76] : memref<10x8xf32, #tpu.memory_space<smem>>
    %c1_77 = arith.constant 1 : index
    %c2_78 = arith.constant 2 : index
    %c1_79 = arith.constant 1 : index
    %101 = vector.load %arg2[%c1_77, %c2_78, %c1_79] : memref<8x18x18xf32, #tpu.memory_space<vmem>>, vector<1x16x16xf32>
    %102 = vector.shape_cast %101 : vector<1x16x16xf32> to vector<16x16xf32>
    %103 = vector.broadcast %100 : f32 to vector<16x16xf32>
    %104 = arith.mulf %103, %102 : vector<16x16xf32>
    %105 = arith.addf %99, %104 : vector<16x16xf32>
    %c8_80 = arith.constant 8 : index
    %c1_81 = arith.constant 1 : index
    %106 = memref.load %arg1[%c8_80, %c1_81] : memref<10x8xf32, #tpu.memory_space<smem>>
    %c1_82 = arith.constant 1 : index
    %c2_83 = arith.constant 2 : index
    %c2_84 = arith.constant 2 : index
    %107 = vector.load %arg2[%c1_82, %c2_83, %c2_84] : memref<8x18x18xf32, #tpu.memory_space<vmem>>, vector<1x16x16xf32>
    %108 = vector.shape_cast %107 : vector<1x16x16xf32> to vector<16x16xf32>
    %109 = vector.broadcast %106 : f32 to vector<16x16xf32>
    %110 = arith.mulf %109, %108 : vector<16x16xf32>
    %111 = arith.addf %105, %110 : vector<16x16xf32>
    %c9_85 = arith.constant 9 : index
    %c1_86 = arith.constant 1 : index
    %112 = memref.load %arg1[%c9_85, %c1_86] : memref<10x8xf32, #tpu.memory_space<smem>>
    %113 = vector.broadcast %112 : f32 to vector<16x16xf32>
    %114 = arith.addf %111, %113 : vector<16x16xf32>
    %c1_87 = arith.constant 1 : index
    %c0_88 = arith.constant 0 : index
    %c0_89 = arith.constant 0 : index
    %115 = vector.load %arg3[%c1_87, %c0_88, %c0_89] : memref<8x16x16xf32, #tpu.memory_space<vmem>>, vector<1x16x16xf32>
    %116 = vector.shape_cast %115 : vector<1x16x16xf32> to vector<16x16xf32>
    %117 = vector.shape_cast %114 : vector<16x16xf32> to vector<1x16x16xf32>
    tpu.vector_store %arg3[%c1_87, %c0_88, %c0_89], %117 {strides = array<i32>} : memref<8x16x16xf32, #tpu.memory_space<vmem>>, vector<1x16x16xf32>,
    %c0_90 = arith.constant 0 : index
    %c2_91 = arith.constant 2 : index
    %118 = memref.load %arg1[%c0_90, %c2_91] : memref<10x8xf32, #tpu.memory_space<smem>>
    %c2_92 = arith.constant 2 : index
    %c0_93 = arith.constant 0 : index
    %c0_94 = arith.constant 0 : index
    %119 = vector.load %arg2[%c2_92, %c0_93, %c0_94] : memref<8x18x18xf32, #tpu.memory_space<vmem>>, vector<1x16x16xf32>
    %120 = vector.shape_cast %119 : vector<1x16x16xf32> to vector<16x16xf32>
    %121 = vector.broadcast %118 : f32 to vector<16x16xf32>
    %122 = arith.mulf %121, %120 : vector<16x16xf32>
    %c1_95 = arith.constant 1 : index
    %c2_96 = arith.constant 2 : index
    %123 = memref.load %arg1[%c1_95, %c2_96] : memref<10x8xf32, #tpu.memory_space<smem>>
    %c2_97 = arith.constant 2 : index
    %c0_98 = arith.constant 0 : index
    %c1_99 = arith.constant 1 : index
    %124 = vector.load %arg2[%c2_97, %c0_98, %c1_99] : memref<8x18x18xf32, #tpu.memory_space<vmem>>, vector<1x16x16xf32>
    %125 = vector.shape_cast %124 : vector<1x16x16xf32> to vector<16x16xf32>
    %126 = vector.broadcast %123 : f32 to vector<16x16xf32>
    %127 = arith.mulf %126, %125 : vector<16x16xf32>
    %128 = arith.addf %122, %127 : vector<16x16xf32>
    %c2_100 = arith.constant 2 : index
    %c2_101 = arith.constant 2 : index
    %129 = memref.load %arg1[%c2_100, %c2_101] : memref<10x8xf32, #tpu.memory_space<smem>>
    %c2_102 = arith.constant 2 : index
    %c0_103 = arith.constant 0 : index
    %c2_104 = arith.constant 2 : index
    %130 = vector.load %arg2[%c2_102, %c0_103, %c2_104] : memref<8x18x18xf32, #tpu.memory_space<vmem>>, vector<1x16x16xf32>
    %131 = vector.shape_cast %130 : vector<1x16x16xf32> to vector<16x16xf32>
    %132 = vector.broadcast %129 : f32 to vector<16x16xf32>
    %133 = arith.mulf %132, %131 : vector<16x16xf32>
    %134 = arith.addf %128, %133 : vector<16x16xf32>
    %c3_105 = arith.constant 3 : index
    %c2_106 = arith.constant 2 : index
    %135 = memref.load %arg1[%c3_105, %c2_106] : memref<10x8xf32, #tpu.memory_space<smem>>
    %c2_107 = arith.constant 2 : index
    %c1_108 = arith.constant 1 : index
    %c0_109 = arith.constant 0 : index
    %136 = vector.load %arg2[%c2_107, %c1_108, %c0_109] : memref<8x18x18xf32, #tpu.memory_space<vmem>>, vector<1x16x16xf32>
    %137 = vector.shape_cast %136 : vector<1x16x16xf32> to vector<16x16xf32>
    %138 = vector.broadcast %135 : f32 to vector<16x16xf32>
    %139 = arith.mulf %138, %137 : vector<16x16xf32>
    %140 = arith.addf %134, %139 : vector<16x16xf32>
    %c4_110 = arith.constant 4 : index
    %c2_111 = arith.constant 2 : index
    %141 = memref.load %arg1[%c4_110, %c2_111] : memref<10x8xf32, #tpu.memory_space<smem>>
    %c2_112 = arith.constant 2 : index
    %c1_113 = arith.constant 1 : index
    %c1_114 = arith.constant 1 : index
    %142 = vector.load %arg2[%c2_112, %c1_113, %c1_114] : memref<8x18x18xf32, #tpu.memory_space<vmem>>, vector<1x16x16xf32>
    %143 = vector.shape_cast %142 : vector<1x16x16xf32> to vector<16x16xf32>
    %144 = vector.broadcast %141 : f32 to vector<16x16xf32>
    %145 = arith.mulf %144, %143 : vector<16x16xf32>
    %146 = arith.addf %140, %145 : vector<16x16xf32>
    %c5_115 = arith.constant 5 : index
    %c2_116 = arith.constant 2 : index
    %147 = memref.load %arg1[%c5_115, %c2_116] : memref<10x8xf32, #tpu.memory_space<smem>>
    %c2_117 = arith.constant 2 : index
    %c1_118 = arith.constant 1 : index
    %c2_119 = arith.constant 2 : index
    %148 = vector.load %arg2[%c2_117, %c1_118, %c2_119] : memref<8x18x18xf32, #tpu.memory_space<vmem>>, vector<1x16x16xf32>
    %149 = vector.shape_cast %148 : vector<1x16x16xf32> to vector<16x16xf32>
    %150 = vector.broadcast %147 : f32 to vector<16x16xf32>
    %151 = arith.mulf %150, %149 : vector<16x16xf32>
    %152 = arith.addf %146, %151 : vector<16x16xf32>
    %c6_120 = arith.constant 6 : index
    %c2_121 = arith.constant 2 : index
    %153 = memref.load %arg1[%c6_120, %c2_121] : memref<10x8xf32, #tpu.memory_space<smem>>
    %c2_122 = arith.constant 2 : index
    %c2_123 = arith.constant 2 : index
    %c0_124 = arith.constant 0 : index
    %154 = vector.load %arg2[%c2_122, %c2_123, %c0_124] : memref<8x18x18xf32, #tpu.memory_space<vmem>>, vector<1x16x16xf32>
    %155 = vector.shape_cast %154 : vector<1x16x16xf32> to vector<16x16xf32>
    %156 = vector.broadcast %153 : f32 to vector<16x16xf32>
    %157 = arith.mulf %156, %155 : vector<16x16xf32>
    %158 = arith.addf %152, %157 : vector<16x16xf32>
    %c7_125 = arith.constant 7 : index
    %c2_126 = arith.constant 2 : index
    %159 = memref.load %arg1[%c7_125, %c2_126] : memref<10x8xf32, #tpu.memory_space<smem>>
    %c2_127 = arith.constant 2 : index
    %c2_128 = arith.constant 2 : index
    %c1_129 = arith.constant 1 : index
    %160 = vector.load %arg2[%c2_127, %c2_128, %c1_129] : memref<8x18x18xf32, #tpu.memory_space<vmem>>, vector<1x16x16xf32>
    %161 = vector.shape_cast %160 : vector<1x16x16xf32> to vector<16x16xf32>
    %162 = vector.broadcast %159 : f32 to vector<16x16xf32>
    %163 = arith.mulf %162, %161 : vector<16x16xf32>
    %164 = arith.addf %158, %163 : vector<16x16xf32>
    %c8_130 = arith.constant 8 : index
    %c2_131 = arith.constant 2 : index
    %165 = memref.load %arg1[%c8_130, %c2_131] : memref<10x8xf32, #tpu.memory_space<smem>>
    %c2_132 = arith.constant 2 : index
    %c2_133 = arith.constant 2 : index
    %c2_134 = arith.constant 2 : index
    %166 = vector.load %arg2[%c2_132, %c2_133, %c2_134] : memref<8x18x18xf32, #tpu.memory_space<vmem>>, vector<1x16x16xf32>
    %167 = vector.shape_cast %166 : vector<1x16x16xf32> to vector<16x16xf32>
    %168 = vector.broadcast %165 : f32 to vector<16x16xf32>
    %169 = arith.mulf %168, %167 : vector<16x16xf32>
    %170 = arith.addf %164, %169 : vector<16x16xf32>
    %c9_135 = arith.constant 9 : index
    %c2_136 = arith.constant 2 : index
    %171 = memref.load %arg1[%c9_135, %c2_136] : memref<10x8xf32, #tpu.memory_space<smem>>
    %172 = vector.broadcast %171 : f32 to vector<16x16xf32>
    %173 = arith.addf %170, %172 : vector<16x16xf32>
    %c2_137 = arith.constant 2 : index
    %c0_138 = arith.constant 0 : index
    %c0_139 = arith.constant 0 : index
    %174 = vector.load %arg3[%c2_137, %c0_138, %c0_139] : memref<8x16x16xf32, #tpu.memory_space<vmem>>, vector<1x16x16xf32>
    %175 = vector.shape_cast %174 : vector<1x16x16xf32> to vector<16x16xf32>
    %176 = vector.shape_cast %173 : vector<16x16xf32> to vector<1x16x16xf32>
    tpu.vector_store %arg3[%c2_137, %c0_138, %c0_139], %176 {strides = array<i32>} : memref<8x16x16xf32, #tpu.memory_space<vmem>>, vector<1x16x16xf32>,
    %c0_140 = arith.constant 0 : index
    %c3_141 = arith.constant 3 : index
    %177 = memref.load %arg1[%c0_140, %c3_141] : memref<10x8xf32, #tpu.memory_space<smem>>
    %c3_142 = arith.constant 3 : index
    %c0_143 = arith.constant 0 : index
    %c0_144 = arith.constant 0 : index
    %178 = vector.load %arg2[%c3_142, %c0_143, %c0_144] : memref<8x18x18xf32, #tpu.memory_space<vmem>>, vector<1x16x16xf32>
    %179 = vector.shape_cast %178 : vector<1x16x16xf32> to vector<16x16xf32>
    %180 = vector.broadcast %177 : f32 to vector<16x16xf32>
    %181 = arith.mulf %180, %179 : vector<16x16xf32>
    %c1_145 = arith.constant 1 : index
    %c3_146 = arith.constant 3 : index
    %182 = memref.load %arg1[%c1_145, %c3_146] : memref<10x8xf32, #tpu.memory_space<smem>>
    %c3_147 = arith.constant 3 : index
    %c0_148 = arith.constant 0 : index
    %c1_149 = arith.constant 1 : index
    %183 = vector.load %arg2[%c3_147, %c0_148, %c1_149] : memref<8x18x18xf32, #tpu.memory_space<vmem>>, vector<1x16x16xf32>
    %184 = vector.shape_cast %183 : vector<1x16x16xf32> to vector<16x16xf32>
    %185 = vector.broadcast %182 : f32 to vector<16x16xf32>
    %186 = arith.mulf %185, %184 : vector<16x16xf32>
    %187 = arith.addf %181, %186 : vector<16x16xf32>
    %c2_150 = arith.constant 2 : index
    %c3_151 = arith.constant 3 : index
    %188 = memref.load %arg1[%c2_150, %c3_151] : memref<10x8xf32, #tpu.memory_space<smem>>
    %c3_152 = arith.constant 3 : index
    %c0_153 = arith.constant 0 : index
    %c2_154 = arith.constant 2 : index
    %189 = vector.load %arg2[%c3_152, %c0_153, %c2_154] : memref<8x18x18xf32, #tpu.memory_space<vmem>>, vector<1x16x16xf32>
    %190 = vector.shape_cast %189 : vector<1x16x16xf32> to vector<16x16xf32>
    %191 = vector.broadcast %188 : f32 to vector<16x16xf32>
    %192 = arith.mulf %191, %190 : vector<16x16xf32>
    %193 = arith.addf %187, %192 : vector<16x16xf32>
    %c3_155 = arith.constant 3 : index
    %c3_156 = arith.constant 3 : index
    %194 = memref.load %arg1[%c3_155, %c3_156] : memref<10x8xf32, #tpu.memory_space<smem>>
    %c3_157 = arith.constant 3 : index
    %c1_158 = arith.constant 1 : index
    %c0_159 = arith.constant 0 : index
    %195 = vector.load %arg2[%c3_157, %c1_158, %c0_159] : memref<8x18x18xf32, #tpu.memory_space<vmem>>, vector<1x16x16xf32>
    %196 = vector.shape_cast %195 : vector<1x16x16xf32> to vector<16x16xf32>
    %197 = vector.broadcast %194 : f32 to vector<16x16xf32>
    %198 = arith.mulf %197, %196 : vector<16x16xf32>
    %199 = arith.addf %193, %198 : vector<16x16xf32>
    %c4_160 = arith.constant 4 : index
    %c3_161 = arith.constant 3 : index
    %200 = memref.load %arg1[%c4_160, %c3_161] : memref<10x8xf32, #tpu.memory_space<smem>>
    %c3_162 = arith.constant 3 : index
    %c1_163 = arith.constant 1 : index
    %c1_164 = arith.constant 1 : index
    %201 = vector.load %arg2[%c3_162, %c1_163, %c1_164] : memref<8x18x18xf32, #tpu.memory_space<vmem>>, vector<1x16x16xf32>
    %202 = vector.shape_cast %201 : vector<1x16x16xf32> to vector<16x16xf32>
    %203 = vector.broadcast %200 : f32 to vector<16x16xf32>
    %204 = arith.mulf %203, %202 : vector<16x16xf32>
    %205 = arith.addf %199, %204 : vector<16x16xf32>
    %c5_165 = arith.constant 5 : index
    %c3_166 = arith.constant 3 : index
    %206 = memref.load %arg1[%c5_165, %c3_166] : memref<10x8xf32, #tpu.memory_space<smem>>
    %c3_167 = arith.constant 3 : index
    %c1_168 = arith.constant 1 : index
    %c2_169 = arith.constant 2 : index
    %207 = vector.load %arg2[%c3_167, %c1_168, %c2_169] : memref<8x18x18xf32, #tpu.memory_space<vmem>>, vector<1x16x16xf32>
    %208 = vector.shape_cast %207 : vector<1x16x16xf32> to vector<16x16xf32>
    %209 = vector.broadcast %206 : f32 to vector<16x16xf32>
    %210 = arith.mulf %209, %208 : vector<16x16xf32>
    %211 = arith.addf %205, %210 : vector<16x16xf32>
    %c6_170 = arith.constant 6 : index
    %c3_171 = arith.constant 3 : index
    %212 = memref.load %arg1[%c6_170, %c3_171] : memref<10x8xf32, #tpu.memory_space<smem>>
    %c3_172 = arith.constant 3 : index
    %c2_173 = arith.constant 2 : index
    %c0_174 = arith.constant 0 : index
    %213 = vector.load %arg2[%c3_172, %c2_173, %c0_174] : memref<8x18x18xf32, #tpu.memory_space<vmem>>, vector<1x16x16xf32>
    %214 = vector.shape_cast %213 : vector<1x16x16xf32> to vector<16x16xf32>
    %215 = vector.broadcast %212 : f32 to vector<16x16xf32>
    %216 = arith.mulf %215, %214 : vector<16x16xf32>
    %217 = arith.addf %211, %216 : vector<16x16xf32>
    %c7_175 = arith.constant 7 : index
    %c3_176 = arith.constant 3 : index
    %218 = memref.load %arg1[%c7_175, %c3_176] : memref<10x8xf32, #tpu.memory_space<smem>>
    %c3_177 = arith.constant 3 : index
    %c2_178 = arith.constant 2 : index
    %c1_179 = arith.constant 1 : index
    %219 = vector.load %arg2[%c3_177, %c2_178, %c1_179] : memref<8x18x18xf32, #tpu.memory_space<vmem>>, vector<1x16x16xf32>
    %220 = vector.shape_cast %219 : vector<1x16x16xf32> to vector<16x16xf32>
    %221 = vector.broadcast %218 : f32 to vector<16x16xf32>
    %222 = arith.mulf %221, %220 : vector<16x16xf32>
    %223 = arith.addf %217, %222 : vector<16x16xf32>
    %c8_180 = arith.constant 8 : index
    %c3_181 = arith.constant 3 : index
    %224 = memref.load %arg1[%c8_180, %c3_181] : memref<10x8xf32, #tpu.memory_space<smem>>
    %c3_182 = arith.constant 3 : index
    %c2_183 = arith.constant 2 : index
    %c2_184 = arith.constant 2 : index
    %225 = vector.load %arg2[%c3_182, %c2_183, %c2_184] : memref<8x18x18xf32, #tpu.memory_space<vmem>>, vector<1x16x16xf32>
    %226 = vector.shape_cast %225 : vector<1x16x16xf32> to vector<16x16xf32>
    %227 = vector.broadcast %224 : f32 to vector<16x16xf32>
    %228 = arith.mulf %227, %226 : vector<16x16xf32>
    %229 = arith.addf %223, %228 : vector<16x16xf32>
    %c9_185 = arith.constant 9 : index
    %c3_186 = arith.constant 3 : index
    %230 = memref.load %arg1[%c9_185, %c3_186] : memref<10x8xf32, #tpu.memory_space<smem>>
    %231 = vector.broadcast %230 : f32 to vector<16x16xf32>
    %232 = arith.addf %229, %231 : vector<16x16xf32>
    %c3_187 = arith.constant 3 : index
    %c0_188 = arith.constant 0 : index
    %c0_189 = arith.constant 0 : index
    %233 = vector.load %arg3[%c3_187, %c0_188, %c0_189] : memref<8x16x16xf32, #tpu.memory_space<vmem>>, vector<1x16x16xf32>
    %234 = vector.shape_cast %233 : vector<1x16x16xf32> to vector<16x16xf32>
    %235 = vector.shape_cast %232 : vector<16x16xf32> to vector<1x16x16xf32>
    tpu.vector_store %arg3[%c3_187, %c0_188, %c0_189], %235 {strides = array<i32>} : memref<8x16x16xf32, #tpu.memory_space<vmem>>, vector<1x16x16xf32>,
    %c0_190 = arith.constant 0 : index
    %c4_191 = arith.constant 4 : index
    %236 = memref.load %arg1[%c0_190, %c4_191] : memref<10x8xf32, #tpu.memory_space<smem>>
    %c4_192 = arith.constant 4 : index
    %c0_193 = arith.constant 0 : index
    %c0_194 = arith.constant 0 : index
    %237 = vector.load %arg2[%c4_192, %c0_193, %c0_194] : memref<8x18x18xf32, #tpu.memory_space<vmem>>, vector<1x16x16xf32>
    %238 = vector.shape_cast %237 : vector<1x16x16xf32> to vector<16x16xf32>
    %239 = vector.broadcast %236 : f32 to vector<16x16xf32>
    %240 = arith.mulf %239, %238 : vector<16x16xf32>
    %c1_195 = arith.constant 1 : index
    %c4_196 = arith.constant 4 : index
    %241 = memref.load %arg1[%c1_195, %c4_196] : memref<10x8xf32, #tpu.memory_space<smem>>
    %c4_197 = arith.constant 4 : index
    %c0_198 = arith.constant 0 : index
    %c1_199 = arith.constant 1 : index
    %242 = vector.load %arg2[%c4_197, %c0_198, %c1_199] : memref<8x18x18xf32, #tpu.memory_space<vmem>>, vector<1x16x16xf32>
    %243 = vector.shape_cast %242 : vector<1x16x16xf32> to vector<16x16xf32>
    %244 = vector.broadcast %241 : f32 to vector<16x16xf32>
    %245 = arith.mulf %244, %243 : vector<16x16xf32>
    %246 = arith.addf %240, %245 : vector<16x16xf32>
    %c2_200 = arith.constant 2 : index
    %c4_201 = arith.constant 4 : index
    %247 = memref.load %arg1[%c2_200, %c4_201] : memref<10x8xf32, #tpu.memory_space<smem>>
    %c4_202 = arith.constant 4 : index
    %c0_203 = arith.constant 0 : index
    %c2_204 = arith.constant 2 : index
    %248 = vector.load %arg2[%c4_202, %c0_203, %c2_204] : memref<8x18x18xf32, #tpu.memory_space<vmem>>, vector<1x16x16xf32>
    %249 = vector.shape_cast %248 : vector<1x16x16xf32> to vector<16x16xf32>
    %250 = vector.broadcast %247 : f32 to vector<16x16xf32>
    %251 = arith.mulf %250, %249 : vector<16x16xf32>
    %252 = arith.addf %246, %251 : vector<16x16xf32>
    %c3_205 = arith.constant 3 : index
    %c4_206 = arith.constant 4 : index
    %253 = memref.load %arg1[%c3_205, %c4_206] : memref<10x8xf32, #tpu.memory_space<smem>>
    %c4_207 = arith.constant 4 : index
    %c1_208 = arith.constant 1 : index
    %c0_209 = arith.constant 0 : index
    %254 = vector.load %arg2[%c4_207, %c1_208, %c0_209] : memref<8x18x18xf32, #tpu.memory_space<vmem>>, vector<1x16x16xf32>
    %255 = vector.shape_cast %254 : vector<1x16x16xf32> to vector<16x16xf32>
    %256 = vector.broadcast %253 : f32 to vector<16x16xf32>
    %257 = arith.mulf %256, %255 : vector<16x16xf32>
    %258 = arith.addf %252, %257 : vector<16x16xf32>
    %c4_210 = arith.constant 4 : index
    %c4_211 = arith.constant 4 : index
    %259 = memref.load %arg1[%c4_210, %c4_211] : memref<10x8xf32, #tpu.memory_space<smem>>
    %c4_212 = arith.constant 4 : index
    %c1_213 = arith.constant 1 : index
    %c1_214 = arith.constant 1 : index
    %260 = vector.load %arg2[%c4_212, %c1_213, %c1_214] : memref<8x18x18xf32, #tpu.memory_space<vmem>>, vector<1x16x16xf32>
    %261 = vector.shape_cast %260 : vector<1x16x16xf32> to vector<16x16xf32>
    %262 = vector.broadcast %259 : f32 to vector<16x16xf32>
    %263 = arith.mulf %262, %261 : vector<16x16xf32>
    %264 = arith.addf %258, %263 : vector<16x16xf32>
    %c5_215 = arith.constant 5 : index
    %c4_216 = arith.constant 4 : index
    %265 = memref.load %arg1[%c5_215, %c4_216] : memref<10x8xf32, #tpu.memory_space<smem>>
    %c4_217 = arith.constant 4 : index
    %c1_218 = arith.constant 1 : index
    %c2_219 = arith.constant 2 : index
    %266 = vector.load %arg2[%c4_217, %c1_218, %c2_219] : memref<8x18x18xf32, #tpu.memory_space<vmem>>, vector<1x16x16xf32>
    %267 = vector.shape_cast %266 : vector<1x16x16xf32> to vector<16x16xf32>
    %268 = vector.broadcast %265 : f32 to vector<16x16xf32>
    %269 = arith.mulf %268, %267 : vector<16x16xf32>
    %270 = arith.addf %264, %269 : vector<16x16xf32>
    %c6_220 = arith.constant 6 : index
    %c4_221 = arith.constant 4 : index
    %271 = memref.load %arg1[%c6_220, %c4_221] : memref<10x8xf32, #tpu.memory_space<smem>>
    %c4_222 = arith.constant 4 : index
    %c2_223 = arith.constant 2 : index
    %c0_224 = arith.constant 0 : index
    %272 = vector.load %arg2[%c4_222, %c2_223, %c0_224] : memref<8x18x18xf32, #tpu.memory_space<vmem>>, vector<1x16x16xf32>
    %273 = vector.shape_cast %272 : vector<1x16x16xf32> to vector<16x16xf32>
    %274 = vector.broadcast %271 : f32 to vector<16x16xf32>
    %275 = arith.mulf %274, %273 : vector<16x16xf32>
    %276 = arith.addf %270, %275 : vector<16x16xf32>
    %c7_225 = arith.constant 7 : index
    %c4_226 = arith.constant 4 : index
    %277 = memref.load %arg1[%c7_225, %c4_226] : memref<10x8xf32, #tpu.memory_space<smem>>
    %c4_227 = arith.constant 4 : index
    %c2_228 = arith.constant 2 : index
    %c1_229 = arith.constant 1 : index
    %278 = vector.load %arg2[%c4_227, %c2_228, %c1_229] : memref<8x18x18xf32, #tpu.memory_space<vmem>>, vector<1x16x16xf32>
    %279 = vector.shape_cast %278 : vector<1x16x16xf32> to vector<16x16xf32>
    %280 = vector.broadcast %277 : f32 to vector<16x16xf32>
    %281 = arith.mulf %280, %279 : vector<16x16xf32>
    %282 = arith.addf %276, %281 : vector<16x16xf32>
    %c8_230 = arith.constant 8 : index
    %c4_231 = arith.constant 4 : index
    %283 = memref.load %arg1[%c8_230, %c4_231] : memref<10x8xf32, #tpu.memory_space<smem>>
    %c4_232 = arith.constant 4 : index
    %c2_233 = arith.constant 2 : index
    %c2_234 = arith.constant 2 : index
    %284 = vector.load %arg2[%c4_232, %c2_233, %c2_234] : memref<8x18x18xf32, #tpu.memory_space<vmem>>, vector<1x16x16xf32>
    %285 = vector.shape_cast %284 : vector<1x16x16xf32> to vector<16x16xf32>
    %286 = vector.broadcast %283 : f32 to vector<16x16xf32>
    %287 = arith.mulf %286, %285 : vector<16x16xf32>
    %288 = arith.addf %282, %287 : vector<16x16xf32>
    %c9_235 = arith.constant 9 : index
    %c4_236 = arith.constant 4 : index
    %289 = memref.load %arg1[%c9_235, %c4_236] : memref<10x8xf32, #tpu.memory_space<smem>>
    %290 = vector.broadcast %289 : f32 to vector<16x16xf32>
    %291 = arith.addf %288, %290 : vector<16x16xf32>
    %c4_237 = arith.constant 4 : index
    %c0_238 = arith.constant 0 : index
    %c0_239 = arith.constant 0 : index
    %292 = vector.load %arg3[%c4_237, %c0_238, %c0_239] : memref<8x16x16xf32, #tpu.memory_space<vmem>>, vector<1x16x16xf32>
    %293 = vector.shape_cast %292 : vector<1x16x16xf32> to vector<16x16xf32>
    %294 = vector.shape_cast %291 : vector<16x16xf32> to vector<1x16x16xf32>
    tpu.vector_store %arg3[%c4_237, %c0_238, %c0_239], %294 {strides = array<i32>} : memref<8x16x16xf32, #tpu.memory_space<vmem>>, vector<1x16x16xf32>,
    %c0_240 = arith.constant 0 : index
    %c5_241 = arith.constant 5 : index
    %295 = memref.load %arg1[%c0_240, %c5_241] : memref<10x8xf32, #tpu.memory_space<smem>>
    %c5_242 = arith.constant 5 : index
    %c0_243 = arith.constant 0 : index
    %c0_244 = arith.constant 0 : index
    %296 = vector.load %arg2[%c5_242, %c0_243, %c0_244] : memref<8x18x18xf32, #tpu.memory_space<vmem>>, vector<1x16x16xf32>
    %297 = vector.shape_cast %296 : vector<1x16x16xf32> to vector<16x16xf32>
    %298 = vector.broadcast %295 : f32 to vector<16x16xf32>
    %299 = arith.mulf %298, %297 : vector<16x16xf32>
    %c1_245 = arith.constant 1 : index
    %c5_246 = arith.constant 5 : index
    %300 = memref.load %arg1[%c1_245, %c5_246] : memref<10x8xf32, #tpu.memory_space<smem>>
    %c5_247 = arith.constant 5 : index
    %c0_248 = arith.constant 0 : index
    %c1_249 = arith.constant 1 : index
    %301 = vector.load %arg2[%c5_247, %c0_248, %c1_249] : memref<8x18x18xf32, #tpu.memory_space<vmem>>, vector<1x16x16xf32>
    %302 = vector.shape_cast %301 : vector<1x16x16xf32> to vector<16x16xf32>
    %303 = vector.broadcast %300 : f32 to vector<16x16xf32>
    %304 = arith.mulf %303, %302 : vector<16x16xf32>
    %305 = arith.addf %299, %304 : vector<16x16xf32>
    %c2_250 = arith.constant 2 : index
    %c5_251 = arith.constant 5 : index
    %306 = memref.load %arg1[%c2_250, %c5_251] : memref<10x8xf32, #tpu.memory_space<smem>>
    %c5_252 = arith.constant 5 : index
    %c0_253 = arith.constant 0 : index
    %c2_254 = arith.constant 2 : index
    %307 = vector.load %arg2[%c5_252, %c0_253, %c2_254] : memref<8x18x18xf32, #tpu.memory_space<vmem>>, vector<1x16x16xf32>
    %308 = vector.shape_cast %307 : vector<1x16x16xf32> to vector<16x16xf32>
    %309 = vector.broadcast %306 : f32 to vector<16x16xf32>
    %310 = arith.mulf %309, %308 : vector<16x16xf32>
    %311 = arith.addf %305, %310 : vector<16x16xf32>
    %c3_255 = arith.constant 3 : index
    %c5_256 = arith.constant 5 : index
    %312 = memref.load %arg1[%c3_255, %c5_256] : memref<10x8xf32, #tpu.memory_space<smem>>
    %c5_257 = arith.constant 5 : index
    %c1_258 = arith.constant 1 : index
    %c0_259 = arith.constant 0 : index
    %313 = vector.load %arg2[%c5_257, %c1_258, %c0_259] : memref<8x18x18xf32, #tpu.memory_space<vmem>>, vector<1x16x16xf32>
    %314 = vector.shape_cast %313 : vector<1x16x16xf32> to vector<16x16xf32>
    %315 = vector.broadcast %312 : f32 to vector<16x16xf32>
    %316 = arith.mulf %315, %314 : vector<16x16xf32>
    %317 = arith.addf %311, %316 : vector<16x16xf32>
    %c4_260 = arith.constant 4 : index
    %c5_261 = arith.constant 5 : index
    %318 = memref.load %arg1[%c4_260, %c5_261] : memref<10x8xf32, #tpu.memory_space<smem>>
    %c5_262 = arith.constant 5 : index
    %c1_263 = arith.constant 1 : index
    %c1_264 = arith.constant 1 : index
    %319 = vector.load %arg2[%c5_262, %c1_263, %c1_264] : memref<8x18x18xf32, #tpu.memory_space<vmem>>, vector<1x16x16xf32>
    %320 = vector.shape_cast %319 : vector<1x16x16xf32> to vector<16x16xf32>
    %321 = vector.broadcast %318 : f32 to vector<16x16xf32>
    %322 = arith.mulf %321, %320 : vector<16x16xf32>
    %323 = arith.addf %317, %322 : vector<16x16xf32>
    %c5_265 = arith.constant 5 : index
    %c5_266 = arith.constant 5 : index
    %324 = memref.load %arg1[%c5_265, %c5_266] : memref<10x8xf32, #tpu.memory_space<smem>>
    %c5_267 = arith.constant 5 : index
    %c1_268 = arith.constant 1 : index
    %c2_269 = arith.constant 2 : index
    %325 = vector.load %arg2[%c5_267, %c1_268, %c2_269] : memref<8x18x18xf32, #tpu.memory_space<vmem>>, vector<1x16x16xf32>
    %326 = vector.shape_cast %325 : vector<1x16x16xf32> to vector<16x16xf32>
    %327 = vector.broadcast %324 : f32 to vector<16x16xf32>
    %328 = arith.mulf %327, %326 : vector<16x16xf32>
    %329 = arith.addf %323, %328 : vector<16x16xf32>
    %c6_270 = arith.constant 6 : index
    %c5_271 = arith.constant 5 : index
    %330 = memref.load %arg1[%c6_270, %c5_271] : memref<10x8xf32, #tpu.memory_space<smem>>
    %c5_272 = arith.constant 5 : index
    %c2_273 = arith.constant 2 : index
    %c0_274 = arith.constant 0 : index
    %331 = vector.load %arg2[%c5_272, %c2_273, %c0_274] : memref<8x18x18xf32, #tpu.memory_space<vmem>>, vector<1x16x16xf32>
    %332 = vector.shape_cast %331 : vector<1x16x16xf32> to vector<16x16xf32>
    %333 = vector.broadcast %330 : f32 to vector<16x16xf32>
    %334 = arith.mulf %333, %332 : vector<16x16xf32>
    %335 = arith.addf %329, %334 : vector<16x16xf32>
    %c7_275 = arith.constant 7 : index
    %c5_276 = arith.constant 5 : index
    %336 = memref.load %arg1[%c7_275, %c5_276] : memref<10x8xf32, #tpu.memory_space<smem>>
    %c5_277 = arith.constant 5 : index
    %c2_278 = arith.constant 2 : index
    %c1_279 = arith.constant 1 : index
    %337 = vector.load %arg2[%c5_277, %c2_278, %c1_279] : memref<8x18x18xf32, #tpu.memory_space<vmem>>, vector<1x16x16xf32>
    %338 = vector.shape_cast %337 : vector<1x16x16xf32> to vector<16x16xf32>
    %339 = vector.broadcast %336 : f32 to vector<16x16xf32>
    %340 = arith.mulf %339, %338 : vector<16x16xf32>
    %341 = arith.addf %335, %340 : vector<16x16xf32>
    %c8_280 = arith.constant 8 : index
    %c5_281 = arith.constant 5 : index
    %342 = memref.load %arg1[%c8_280, %c5_281] : memref<10x8xf32, #tpu.memory_space<smem>>
    %c5_282 = arith.constant 5 : index
    %c2_283 = arith.constant 2 : index
    %c2_284 = arith.constant 2 : index
    %343 = vector.load %arg2[%c5_282, %c2_283, %c2_284] : memref<8x18x18xf32, #tpu.memory_space<vmem>>, vector<1x16x16xf32>
    %344 = vector.shape_cast %343 : vector<1x16x16xf32> to vector<16x16xf32>
    %345 = vector.broadcast %342 : f32 to vector<16x16xf32>
    %346 = arith.mulf %345, %344 : vector<16x16xf32>
    %347 = arith.addf %341, %346 : vector<16x16xf32>
    %c9_285 = arith.constant 9 : index
    %c5_286 = arith.constant 5 : index
    %348 = memref.load %arg1[%c9_285, %c5_286] : memref<10x8xf32, #tpu.memory_space<smem>>
    %349 = vector.broadcast %348 : f32 to vector<16x16xf32>
    %350 = arith.addf %347, %349 : vector<16x16xf32>
    %c5_287 = arith.constant 5 : index
    %c0_288 = arith.constant 0 : index
    %c0_289 = arith.constant 0 : index
    %351 = vector.load %arg3[%c5_287, %c0_288, %c0_289] : memref<8x16x16xf32, #tpu.memory_space<vmem>>, vector<1x16x16xf32>
    %352 = vector.shape_cast %351 : vector<1x16x16xf32> to vector<16x16xf32>
    %353 = vector.shape_cast %350 : vector<16x16xf32> to vector<1x16x16xf32>
    tpu.vector_store %arg3[%c5_287, %c0_288, %c0_289], %353 {strides = array<i32>} : memref<8x16x16xf32, #tpu.memory_space<vmem>>, vector<1x16x16xf32>,
    %c0_290 = arith.constant 0 : index
    %c6_291 = arith.constant 6 : index
    %354 = memref.load %arg1[%c0_290, %c6_291] : memref<10x8xf32, #tpu.memory_space<smem>>
    %c6_292 = arith.constant 6 : index
    %c0_293 = arith.constant 0 : index
    %c0_294 = arith.constant 0 : index
    %355 = vector.load %arg2[%c6_292, %c0_293, %c0_294] : memref<8x18x18xf32, #tpu.memory_space<vmem>>, vector<1x16x16xf32>
    %356 = vector.shape_cast %355 : vector<1x16x16xf32> to vector<16x16xf32>
    %357 = vector.broadcast %354 : f32 to vector<16x16xf32>
    %358 = arith.mulf %357, %356 : vector<16x16xf32>
    %c1_295 = arith.constant 1 : index
    %c6_296 = arith.constant 6 : index
    %359 = memref.load %arg1[%c1_295, %c6_296] : memref<10x8xf32, #tpu.memory_space<smem>>
    %c6_297 = arith.constant 6 : index
    %c0_298 = arith.constant 0 : index
    %c1_299 = arith.constant 1 : index
    %360 = vector.load %arg2[%c6_297, %c0_298, %c1_299] : memref<8x18x18xf32, #tpu.memory_space<vmem>>, vector<1x16x16xf32>
    %361 = vector.shape_cast %360 : vector<1x16x16xf32> to vector<16x16xf32>
    %362 = vector.broadcast %359 : f32 to vector<16x16xf32>
    %363 = arith.mulf %362, %361 : vector<16x16xf32>
    %364 = arith.addf %358, %363 : vector<16x16xf32>
    %c2_300 = arith.constant 2 : index
    %c6_301 = arith.constant 6 : index
    %365 = memref.load %arg1[%c2_300, %c6_301] : memref<10x8xf32, #tpu.memory_space<smem>>
    %c6_302 = arith.constant 6 : index
    %c0_303 = arith.constant 0 : index
    %c2_304 = arith.constant 2 : index
    %366 = vector.load %arg2[%c6_302, %c0_303, %c2_304] : memref<8x18x18xf32, #tpu.memory_space<vmem>>, vector<1x16x16xf32>
    %367 = vector.shape_cast %366 : vector<1x16x16xf32> to vector<16x16xf32>
    %368 = vector.broadcast %365 : f32 to vector<16x16xf32>
    %369 = arith.mulf %368, %367 : vector<16x16xf32>
    %370 = arith.addf %364, %369 : vector<16x16xf32>
    %c3_305 = arith.constant 3 : index
    %c6_306 = arith.constant 6 : index
    %371 = memref.load %arg1[%c3_305, %c6_306] : memref<10x8xf32, #tpu.memory_space<smem>>
    %c6_307 = arith.constant 6 : index
    %c1_308 = arith.constant 1 : index
    %c0_309 = arith.constant 0 : index
    %372 = vector.load %arg2[%c6_307, %c1_308, %c0_309] : memref<8x18x18xf32, #tpu.memory_space<vmem>>, vector<1x16x16xf32>
    %373 = vector.shape_cast %372 : vector<1x16x16xf32> to vector<16x16xf32>
    %374 = vector.broadcast %371 : f32 to vector<16x16xf32>
    %375 = arith.mulf %374, %373 : vector<16x16xf32>
    %376 = arith.addf %370, %375 : vector<16x16xf32>
    %c4_310 = arith.constant 4 : index
    %c6_311 = arith.constant 6 : index
    %377 = memref.load %arg1[%c4_310, %c6_311] : memref<10x8xf32, #tpu.memory_space<smem>>
    %c6_312 = arith.constant 6 : index
    %c1_313 = arith.constant 1 : index
    %c1_314 = arith.constant 1 : index
    %378 = vector.load %arg2[%c6_312, %c1_313, %c1_314] : memref<8x18x18xf32, #tpu.memory_space<vmem>>, vector<1x16x16xf32>
    %379 = vector.shape_cast %378 : vector<1x16x16xf32> to vector<16x16xf32>
    %380 = vector.broadcast %377 : f32 to vector<16x16xf32>
    %381 = arith.mulf %380, %379 : vector<16x16xf32>
    %382 = arith.addf %376, %381 : vector<16x16xf32>
    %c5_315 = arith.constant 5 : index
    %c6_316 = arith.constant 6 : index
    %383 = memref.load %arg1[%c5_315, %c6_316] : memref<10x8xf32, #tpu.memory_space<smem>>
    %c6_317 = arith.constant 6 : index
    %c1_318 = arith.constant 1 : index
    %c2_319 = arith.constant 2 : index
    %384 = vector.load %arg2[%c6_317, %c1_318, %c2_319] : memref<8x18x18xf32, #tpu.memory_space<vmem>>, vector<1x16x16xf32>
    %385 = vector.shape_cast %384 : vector<1x16x16xf32> to vector<16x16xf32>
    %386 = vector.broadcast %383 : f32 to vector<16x16xf32>
    %387 = arith.mulf %386, %385 : vector<16x16xf32>
    %388 = arith.addf %382, %387 : vector<16x16xf32>
    %c6_320 = arith.constant 6 : index
    %c6_321 = arith.constant 6 : index
    %389 = memref.load %arg1[%c6_320, %c6_321] : memref<10x8xf32, #tpu.memory_space<smem>>
    %c6_322 = arith.constant 6 : index
    %c2_323 = arith.constant 2 : index
    %c0_324 = arith.constant 0 : index
    %390 = vector.load %arg2[%c6_322, %c2_323, %c0_324] : memref<8x18x18xf32, #tpu.memory_space<vmem>>, vector<1x16x16xf32>
    %391 = vector.shape_cast %390 : vector<1x16x16xf32> to vector<16x16xf32>
    %392 = vector.broadcast %389 : f32 to vector<16x16xf32>
    %393 = arith.mulf %392, %391 : vector<16x16xf32>
    %394 = arith.addf %388, %393 : vector<16x16xf32>
    %c7_325 = arith.constant 7 : index
    %c6_326 = arith.constant 6 : index
    %395 = memref.load %arg1[%c7_325, %c6_326] : memref<10x8xf32, #tpu.memory_space<smem>>
    %c6_327 = arith.constant 6 : index
    %c2_328 = arith.constant 2 : index
    %c1_329 = arith.constant 1 : index
    %396 = vector.load %arg2[%c6_327, %c2_328, %c1_329] : memref<8x18x18xf32, #tpu.memory_space<vmem>>, vector<1x16x16xf32>
    %397 = vector.shape_cast %396 : vector<1x16x16xf32> to vector<16x16xf32>
    %398 = vector.broadcast %395 : f32 to vector<16x16xf32>
    %399 = arith.mulf %398, %397 : vector<16x16xf32>
    %400 = arith.addf %394, %399 : vector<16x16xf32>
    %c8_330 = arith.constant 8 : index
    %c6_331 = arith.constant 6 : index
    %401 = memref.load %arg1[%c8_330, %c6_331] : memref<10x8xf32, #tpu.memory_space<smem>>
    %c6_332 = arith.constant 6 : index
    %c2_333 = arith.constant 2 : index
    %c2_334 = arith.constant 2 : index
    %402 = vector.load %arg2[%c6_332, %c2_333, %c2_334] : memref<8x18x18xf32, #tpu.memory_space<vmem>>, vector<1x16x16xf32>
    %403 = vector.shape_cast %402 : vector<1x16x16xf32> to vector<16x16xf32>
    %404 = vector.broadcast %401 : f32 to vector<16x16xf32>
    %405 = arith.mulf %404, %403 : vector<16x16xf32>
    %406 = arith.addf %400, %405 : vector<16x16xf32>
    %c9_335 = arith.constant 9 : index
    %c6_336 = arith.constant 6 : index
    %407 = memref.load %arg1[%c9_335, %c6_336] : memref<10x8xf32, #tpu.memory_space<smem>>
    %408 = vector.broadcast %407 : f32 to vector<16x16xf32>
    %409 = arith.addf %406, %408 : vector<16x16xf32>
    %c6_337 = arith.constant 6 : index
    %c0_338 = arith.constant 0 : index
    %c0_339 = arith.constant 0 : index
    %410 = vector.load %arg3[%c6_337, %c0_338, %c0_339] : memref<8x16x16xf32, #tpu.memory_space<vmem>>, vector<1x16x16xf32>
    %411 = vector.shape_cast %410 : vector<1x16x16xf32> to vector<16x16xf32>
    %412 = vector.shape_cast %409 : vector<16x16xf32> to vector<1x16x16xf32>
    tpu.vector_store %arg3[%c6_337, %c0_338, %c0_339], %412 {strides = array<i32>} : memref<8x16x16xf32, #tpu.memory_space<vmem>>, vector<1x16x16xf32>,
    %c0_340 = arith.constant 0 : index
    %c7_341 = arith.constant 7 : index
    %413 = memref.load %arg1[%c0_340, %c7_341] : memref<10x8xf32, #tpu.memory_space<smem>>
    %c7_342 = arith.constant 7 : index
    %c0_343 = arith.constant 0 : index
    %c0_344 = arith.constant 0 : index
    %414 = vector.load %arg2[%c7_342, %c0_343, %c0_344] : memref<8x18x18xf32, #tpu.memory_space<vmem>>, vector<1x16x16xf32>
    %415 = vector.shape_cast %414 : vector<1x16x16xf32> to vector<16x16xf32>
    %416 = vector.broadcast %413 : f32 to vector<16x16xf32>
    %417 = arith.mulf %416, %415 : vector<16x16xf32>
    %c1_345 = arith.constant 1 : index
    %c7_346 = arith.constant 7 : index
    %418 = memref.load %arg1[%c1_345, %c7_346] : memref<10x8xf32, #tpu.memory_space<smem>>
    %c7_347 = arith.constant 7 : index
    %c0_348 = arith.constant 0 : index
    %c1_349 = arith.constant 1 : index
    %419 = vector.load %arg2[%c7_347, %c0_348, %c1_349] : memref<8x18x18xf32, #tpu.memory_space<vmem>>, vector<1x16x16xf32>
    %420 = vector.shape_cast %419 : vector<1x16x16xf32> to vector<16x16xf32>
    %421 = vector.broadcast %418 : f32 to vector<16x16xf32>
    %422 = arith.mulf %421, %420 : vector<16x16xf32>
    %423 = arith.addf %417, %422 : vector<16x16xf32>
    %c2_350 = arith.constant 2 : index
    %c7_351 = arith.constant 7 : index
    %424 = memref.load %arg1[%c2_350, %c7_351] : memref<10x8xf32, #tpu.memory_space<smem>>
    %c7_352 = arith.constant 7 : index
    %c0_353 = arith.constant 0 : index
    %c2_354 = arith.constant 2 : index
    %425 = vector.load %arg2[%c7_352, %c0_353, %c2_354] : memref<8x18x18xf32, #tpu.memory_space<vmem>>, vector<1x16x16xf32>
    %426 = vector.shape_cast %425 : vector<1x16x16xf32> to vector<16x16xf32>
    %427 = vector.broadcast %424 : f32 to vector<16x16xf32>
    %428 = arith.mulf %427, %426 : vector<16x16xf32>
    %429 = arith.addf %423, %428 : vector<16x16xf32>
    %c3_355 = arith.constant 3 : index
    %c7_356 = arith.constant 7 : index
    %430 = memref.load %arg1[%c3_355, %c7_356] : memref<10x8xf32, #tpu.memory_space<smem>>
    %c7_357 = arith.constant 7 : index
    %c1_358 = arith.constant 1 : index
    %c0_359 = arith.constant 0 : index
    %431 = vector.load %arg2[%c7_357, %c1_358, %c0_359] : memref<8x18x18xf32, #tpu.memory_space<vmem>>, vector<1x16x16xf32>
    %432 = vector.shape_cast %431 : vector<1x16x16xf32> to vector<16x16xf32>
    %433 = vector.broadcast %430 : f32 to vector<16x16xf32>
    %434 = arith.mulf %433, %432 : vector<16x16xf32>
    %435 = arith.addf %429, %434 : vector<16x16xf32>
    %c4_360 = arith.constant 4 : index
    %c7_361 = arith.constant 7 : index
    %436 = memref.load %arg1[%c4_360, %c7_361] : memref<10x8xf32, #tpu.memory_space<smem>>
    %c7_362 = arith.constant 7 : index
    %c1_363 = arith.constant 1 : index
    %c1_364 = arith.constant 1 : index
    %437 = vector.load %arg2[%c7_362, %c1_363, %c1_364] : memref<8x18x18xf32, #tpu.memory_space<vmem>>, vector<1x16x16xf32>
    %438 = vector.shape_cast %437 : vector<1x16x16xf32> to vector<16x16xf32>
    %439 = vector.broadcast %436 : f32 to vector<16x16xf32>
    %440 = arith.mulf %439, %438 : vector<16x16xf32>
    %441 = arith.addf %435, %440 : vector<16x16xf32>
    %c5_365 = arith.constant 5 : index
    %c7_366 = arith.constant 7 : index
    %442 = memref.load %arg1[%c5_365, %c7_366] : memref<10x8xf32, #tpu.memory_space<smem>>
    %c7_367 = arith.constant 7 : index
    %c1_368 = arith.constant 1 : index
    %c2_369 = arith.constant 2 : index
    %443 = vector.load %arg2[%c7_367, %c1_368, %c2_369] : memref<8x18x18xf32, #tpu.memory_space<vmem>>, vector<1x16x16xf32>
    %444 = vector.shape_cast %443 : vector<1x16x16xf32> to vector<16x16xf32>
    %445 = vector.broadcast %442 : f32 to vector<16x16xf32>
    %446 = arith.mulf %445, %444 : vector<16x16xf32>
    %447 = arith.addf %441, %446 : vector<16x16xf32>
    %c6_370 = arith.constant 6 : index
    %c7_371 = arith.constant 7 : index
    %448 = memref.load %arg1[%c6_370, %c7_371] : memref<10x8xf32, #tpu.memory_space<smem>>
    %c7_372 = arith.constant 7 : index
    %c2_373 = arith.constant 2 : index
    %c0_374 = arith.constant 0 : index
    %449 = vector.load %arg2[%c7_372, %c2_373, %c0_374] : memref<8x18x18xf32, #tpu.memory_space<vmem>>, vector<1x16x16xf32>
    %450 = vector.shape_cast %449 : vector<1x16x16xf32> to vector<16x16xf32>
    %451 = vector.broadcast %448 : f32 to vector<16x16xf32>
    %452 = arith.mulf %451, %450 : vector<16x16xf32>
    %453 = arith.addf %447, %452 : vector<16x16xf32>
    %c7_375 = arith.constant 7 : index
    %c7_376 = arith.constant 7 : index
    %454 = memref.load %arg1[%c7_375, %c7_376] : memref<10x8xf32, #tpu.memory_space<smem>>
    %c7_377 = arith.constant 7 : index
    %c2_378 = arith.constant 2 : index
    %c1_379 = arith.constant 1 : index
    %455 = vector.load %arg2[%c7_377, %c2_378, %c1_379] : memref<8x18x18xf32, #tpu.memory_space<vmem>>, vector<1x16x16xf32>
    %456 = vector.shape_cast %455 : vector<1x16x16xf32> to vector<16x16xf32>
    %457 = vector.broadcast %454 : f32 to vector<16x16xf32>
    %458 = arith.mulf %457, %456 : vector<16x16xf32>
    %459 = arith.addf %453, %458 : vector<16x16xf32>
    %c8_380 = arith.constant 8 : index
    %c7_381 = arith.constant 7 : index
    %460 = memref.load %arg1[%c8_380, %c7_381] : memref<10x8xf32, #tpu.memory_space<smem>>
    %c7_382 = arith.constant 7 : index
    %c2_383 = arith.constant 2 : index
    %c2_384 = arith.constant 2 : index
    %461 = vector.load %arg2[%c7_382, %c2_383, %c2_384] : memref<8x18x18xf32, #tpu.memory_space<vmem>>, vector<1x16x16xf32>
    %462 = vector.shape_cast %461 : vector<1x16x16xf32> to vector<16x16xf32>
    %463 = vector.broadcast %460 : f32 to vector<16x16xf32>
    %464 = arith.mulf %463, %462 : vector<16x16xf32>
    %465 = arith.addf %459, %464 : vector<16x16xf32>
    %c9_385 = arith.constant 9 : index
    %c7_386 = arith.constant 7 : index
    %466 = memref.load %arg1[%c9_385, %c7_386] : memref<10x8xf32, #tpu.memory_space<smem>>
    %467 = vector.broadcast %466 : f32 to vector<16x16xf32>
    %468 = arith.addf %465, %467 : vector<16x16xf32>
    %c7_387 = arith.constant 7 : index
    %c0_388 = arith.constant 0 : index
    %c0_389 = arith.constant 0 : index
    %469 = vector.load %arg3[%c7_387, %c0_388, %c0_389] : memref<8x16x16xf32, #tpu.memory_space<vmem>>, vector<1x16x16xf32>
    %470 = vector.shape_cast %469 : vector<1x16x16xf32> to vector<16x16xf32>
    %471 = vector.shape_cast %468 : vector<16x16xf32> to vector<1x16x16xf32>
    tpu.vector_store %arg3[%c7_387, %c0_388, %c0_389], %471 {strides = array<i32>} : memref<8x16x16xf32, #tpu.memory_space<vmem>>, vector<1x16x16xf32>,
    return
  }
  func.func @transform_0(%arg0: i32) -> (i32, i32) {
    %c0_i32 = arith.constant 0 : i32
    %c0_i32_0 = arith.constant 0 : i32
    %c0_i32_1 = arith.constant 0 : i32
    return %c0_i32, %c0_i32_0 : i32, i32
  }
  func.func @transform_1(%arg0: i32) -> (i32, i32, i32) {
    %c0_i32 = arith.constant 0 : i32
    %c0_i32_0 = arith.constant 0 : i32
    %c0_i32_1 = arith.constant 0 : i32
    %c0_i32_2 = arith.constant 0 : i32
    return %c0_i32, %c0_i32_0, %c0_i32_1 : i32, i32, i32
  }
  func.func @transform_2(%arg0: i32) -> (i32, i32, i32) {
    %c0_i32 = arith.constant 0 : i32
    %c0_i32_0 = arith.constant 0 : i32
    %c0_i32_1 = arith.constant 0 : i32
    %c0_i32_2 = arith.constant 0 : i32
    return %c0_i32, %c0_i32_0, %c0_i32_1 : i32, i32, i32
  }
}

</mosaic_0001>

<llo_original>
// kernel: tile.22
$region0: #{tile.22}
  #allocation0 [shape = 's32[1]{0}', space=sflag, size = 0x4, scoped, tag = 'scoped memory for tile.22']
  %s0 = inlined_call_operand.vmem [shape: f32[32], index: 0, kind: input, shape index: {}]
  %s1 = inlined_call_operand.vmem [shape: f32[2,32], index: 1, kind: output, shape index: {}]
  // Predicated region
  $region2: #{tile.22} parent=0 // pred_check
    _
  $region3: #{tile.22} parent=0 // pred_check_branch
    %3 = sbr.rel (0) target = $region5
  $region4: #{tile.22} parent=0 // pred_region
    _
  $region5: #{tile.22} parent=0 // pred_fallthru
    _
  %v4 = vld [vmem:[%s0] ss:$0 sm:$0xff]
  %5 = vst [vmem:[%s1] sm:$0x3] %v4

// kernel: tile.23
$region0: #{tile.23}
  %s0 = inlined_call_operand.vmem [shape: f32[2,32], index: 0, kind: input, shape index: {}]
  %s1 = inlined_call_operand.vmem [shape: f32[1,64], index: 1, kind: output, shape index: {}]
  $region1: #{tile.23} parent=0
    #allocation0 [shape = 'u8[4096]{0}', space=vmem, size = 0x1000, scoped, tag = 'scoped mem for output reshape']
    #allocation1 [shape = 'u8[4096]{0}', space=vmem, size = 0x1000, scoped, tag = 'scoped mem for input reshape']
    %s3 = sshllo.u32 0, 2
    %v4 = vld [vmem:[%s0] sm:%s3]
    %5 = vst [vmem:[#allocation1] sm:%s3] %v4
    %v6 = vld [vmem:[#allocation1] sm:$0x1]
    %vm7 = vcmask 261120
    %8 = vst.msk [vmem:[#allocation0] sm:$0x1] %vm7, %v6
    %s9 = scalar_lea.vmem [#allocation1], 1
    %v10 = vld [vmem:[%s9] sm:$0x1]
    %11 = vrot.lane.b32.xlu0 %v10, 32
    %v12 = vpop.permute.xlu0 %11
    %vm13 = vcmask 523520
    %14 = vst.msk [vmem:[#allocation0] sm:$0x1] %vm13, %v12
    %s16 = sshllo.u32 0, 1
    %v18 = vld [vmem:[#allocation0] sm:%s16]
    %s19 = sshllo.u32 0, 1
    %20 = vst [vmem:[%s1] sm:%s19] %v18

// kernel: tile.27
$region0: #{tile.27}
  %s0 = inlined_call_operand.vmem [shape: f32[10,2,32], index: 0, kind: input, shape index: {}]
  %s1 = inlined_call_operand.vmem [shape: f32[10,64], index: 1, kind: output, shape index: {}]
  $region1: #{tile.27} parent=0
    #allocation0 [shape = 'u8[40960]{0}', space=vmem, size = 0xa000, scoped, tag = 'scoped mem for input reshape']
    %s3 = sshllo.u32 0, 2
    %s4 = smul.addr 2, 9
    %s5 = scalar_lea.vmem %s0, %s4
    %v6 = vld [vmem:[%s5] sm:%s3]
    %s7 = scalar_lea.vmem [#allocation0], 72
    %8 = vst [vmem:[%s7] sm:%s3] %v6
    %s9 = smul.addr 2, 8
    %s10 = scalar_lea.vmem %s0, %s9
    %v11 = vld [vmem:[%s10] sm:%s3]
    %s12 = scalar_lea.vmem [#allocation0], 64
    %13 = vst [vmem:[%s12] sm:%s3] %v11
    %s14 = smul.addr 2, 7
    %s15 = scalar_lea.vmem %s0, %s14
    %v16 = vld [vmem:[%s15] sm:%s3]
    %s17 = scalar_lea.vmem [#allocation0], 56
    %18 = vst [vmem:[%s17] sm:%s3] %v16
    %s19 = smul.addr 2, 6
    %s20 = scalar_lea.vmem %s0, %s19
    %v21 = vld [vmem:[%s20] sm:%s3]
    %s22 = scalar_lea.vmem [#allocation0], 48
    %23 = vst [vmem:[%s22] sm:%s3] %v21
    %s24 = smul.addr 2, 5
    %s25 = scalar_lea.vmem %s0, %s24
    %v26 = vld [vmem:[%s25] sm:%s3]
    %s27 = scalar_lea.vmem [#allocation0], 40
    %28 = vst [vmem:[%s27] sm:%s3] %v26
    %s29 = smul.addr 2, 4
    %s30 = scalar_lea.vmem %s0, %s29
    %v31 = vld [vmem:[%s30] sm:%s3]
    %s32 = scalar_lea.vmem [#allocation0], 32
    %33 = vst [vmem:[%s32] sm:%s3] %v31
    %s34 = smul.addr 2, 3
    %s35 = scalar_lea.vmem %s0, %s34
    %v36 = vld [vmem:[%s35] sm:%s3]
    %s37 = scalar_lea.vmem [#allocation0], 24
    %38 = vst [vmem:[%s37] sm:%s3] %v36
    %s39 = smul.addr 2, 2
    %s40 = scalar_lea.vmem %s0, %s39
    %v41 = vld [vmem:[%s40] sm:%s3]
    %s42 = scalar_lea.vmem [#allocation0], 16
    %43 = vst [vmem:[%s42] sm:%s3] %v41
    %s44 = scalar_lea.vmem %s0, 2
    %v45 = vld [vmem:[%s44] sm:%s3]
    %s46 = scalar_lea.vmem [#allocation0], 8
    %47 = vst [vmem:[%s46] sm:%s3] %v45
    %v48 = vld [vmem:[%s0] sm:%s3]
    %49 = vst [vmem:[#allocation0] sm:%s3] %v48
    %v50 = vld [vmem:[#allocation0] ss:$8 sm:$0xf]
    %v51 = vld [vmem:[#allocation0] ss:$8 sm:$0xf0]
    %vm52 = vcmask 1047556
    %v53 = vsel %vm52, %v51, %v50
    %vm54 = vcmask 261120
    %55 = vst.msk [vmem:[%s1] sm:$0xff] %vm54, %v53
    %s56 = scalar_lea.vmem [#allocation0], 64
    %s57 = smov 3
    %v58 = vld [vmem:[%s56] ss:$8 sm:%s57]
    %vm59 = vcmask 261120
    %s60 = scalar_lea.vmem %s1, 8
    %61 = vst.msk [vmem:[%s60] sm:$0x3] %vm59, %v58
    %s62 = scalar_lea.vmem [#allocation0], 1
    %v63 = vld [vmem:[%s62] ss:$8 sm:$0xf]
    %s64 = scalar_lea.vmem [#allocation0], 1
    %v65 = vld [vmem:[%s64] ss:$8 sm:$0xf0]
    %vm66 = vcmask 1047556
    %v67 = vsel %vm66, %v65, %v63
    %68 = vrot.lane.b32.xlu0 %v67, 32
    %v69 = vpop.permute.xlu0 %68
    %vm70 = vcmask 523520
    %71 = vst.msk [vmem:[%s1] sm:$0xff] %vm70, %v69
    %s72 = scalar_lea.vmem [#allocation0], 65
    %s73 = smov 3
    %v74 = vld [vmem:[%s72] ss:$8 sm:%s73]
    %75 = vrot.lane.b32.xlu0 %v74, 32
    %v76 = vpop.permute.xlu0 %75
    %vm77 = vcmask 523520
    %s78 = scalar_lea.vmem %s1, 8
    %79 = vst.msk [vmem:[%s78] sm:$0x3] %vm77, %v76

// kernel: tile.18
$region0: #{tile.18}
  %s0 = inlined_call_operand.vmem [shape: f32[2,2], index: 0, kind: input, shape index: {}]
  %s1 = inlined_call_operand.vmem [shape: f32[1,4], index: 1, kind: output, shape index: {}]
  $region1: #{tile.18} parent=0
    #allocation0 [shape = 'u8[4096]{0}', space=vmem, size = 0x1000, scoped, tag = 'scoped mem for output reshape']
    #allocation1 [shape = 'u8[4096]{0}', space=vmem, size = 0x1000, scoped, tag = 'scoped mem for input reshape']
    %s3 = sshllo.u32 0, 2
    %v4 = vld [vmem:[%s0] sm:%s3]
    %5 = vst [vmem:[#allocation1] sm:%s3] %v4
    %v6 = vld [vmem:[#allocation1] sm:$0x1]
    %vm7 = vcmask 15360
    %8 = vst.msk [vmem:[#allocation0] sm:$0x1] %vm7, %v6
    %s9 = scalar_lea.vmem [#allocation1], 1
    %v10 = vld [vmem:[%s9] sm:$0x1]
    %11 = vrot.lane.b32.xlu0 %v10, 2
    %v12 = vpop.permute.xlu0 %11
    %vm13 = vcmask 31760
    %14 = vst.msk [vmem:[#allocation0] sm:$0x1] %vm13, %v12
    %s16 = sshllo.u32 0, 1
    %v18 = vld [vmem:[#allocation0] sm:%s16]
    %s19 = sshllo.u32 0, 1
    %20 = vst [vmem:[%s1] sm:%s19] %v18

// kernel: tile.17
$region0: #{tile.17}
  #allocation0 [shape = 's32[1]{0}', space=sflag, size = 0x4, scoped, tag = 'scoped memory for tile.17']
  %s0 = inlined_call_operand.vmem [shape: f32[2], index: 0, kind: input, shape index: {}]
  %s1 = inlined_call_operand.vmem [shape: f32[2,2], index: 1, kind: output, shape index: {}]
  // Predicated region
  $region2: #{tile.17} parent=0 // pred_check
    _
  $region3: #{tile.17} parent=0 // pred_check_branch
    %3 = sbr.rel (0) target = $region5
  $region4: #{tile.17} parent=0 // pred_region
    _
  $region5: #{tile.17} parent=0 // pred_fallthru
    _
  %v4 = vld [vmem:[%s0] ss:$0 sm:$0xff]
  %5 = vst [vmem:[%s1] sm:$0x3] %v4

</llo_original>
